<compile_context>
chip_gen: v7x
topology: tpu7x:2x2x1
jax: 0.10.0
libtpu: 0.0.40
codegen_flags: <defaults>
</compile_context>

<pallas_src>
import functools

import jax
import jax.numpy as jnp
from jax import lax
from jax.experimental import pallas as pl
from jax.experimental.pallas import tpu as pltpu

NODE_FEAT_DIM = 8
D_MODEL = 32
EDGE_DIM = 6
HEADS = 4
HEAD_DIM = D_MODEL // HEADS          # GATConv out_channels = d_model / heads
N_LAYERS = 3
N_NODES = 16

# ---- constant-pack row offsets (single [CP_ROWS, D_MODEL] f32 buffer) -------
# All section starts are multiples of 8 so in-kernel sublane slices are aligned.
LPW_OFF = 0                                    # [F, D]   LinearProj weight
LPB_OFF = LPW_OFF + NODE_FEAT_DIM              # [1, D]   LinearProj bias
WLIN_OFF = 16                                  # L x [D, D]   GATConv node projections
WSD_OFF = WLIN_OFF + N_LAYERS * D_MODEL        # L x [D, 2H]  wlin @ (att_dst | att_src), cols 0:2H
BIAS_OFF = WSD_OFF + N_LAYERS * D_MODEL        # L x [1, D]   conv biases (one row every 8)
HM_OFF = BIAS_OFF + N_LAYERS * 8               # [H*N, D]     head block mask * 1/deg
CP_ROWS = HM_OFF + HEADS * N_NODES             # 296

_VMEM = pl.BlockSpec(memory_space=pltpu.MemorySpace.VMEM)


# ----------------------------- Pallas kernel ------------------------------- #

def gatc_kernel(x_ref, ae_ref, cp_ref, o_ref, *, heads, head_dim, n_layers):
    """Fused GATC forward: LinearProj + 3x (GATConv + residual + ReLU).

    Shapes (N = #nodes, D = d_model, H = heads, L = layers, F = node_feat_dim):
      x_ref  [N, F]            node features
      ae_ref [L, H, N, N]      pre-contracted edge-attention term + (-1e30) adjacency mask
      cp_ref [CP_ROWS, D]      packed constants (see offsets above)
      o_ref  [N, D]            output
    """
    n = x_ref.shape[0]
    f = x_ref.shape[1]
    d = heads * head_dim
    two_h = 2 * heads

    # Unpack constants (static, 8-aligned sublane slices of the packed buffer).
    lp_w = cp_ref[LPW_OFF:LPW_OFF + f, :]                   # [F, D]
    lp_b = cp_ref[LPB_OFF:LPB_OFF + 1, :]                   # [1, D]
    hm = cp_ref[HM_OFF:HM_OFF + heads * n, :]               # [H*N, D]  blockdiag mask * 1/deg

    # LinearProj: h = x @ W + b
    h = jnp.dot(x_ref[...], lp_w, preferred_element_type=jnp.float32) + lp_b    # [N, D]

    for l in range(n_layers):                               # static, unrolled
        wlin = cp_ref[WLIN_OFF + l * d:WLIN_OFF + (l + 1) * d, :]               # [D, D]
        wsd = cp_ref[WSD_OFF + l * d:WSD_OFF + (l + 1) * d, 0:two_h]            # [D, 2H]
        bias = cp_ref[BIAS_OFF + 8 * l:BIAS_OFF + 8 * l + 1, :]                 # [1, D]

        # Two independent MXU matmuls per layer (both read only `h`):
        #   xp       : node projection (bias-free, as in PyG GATConv.lin)
        #   sd[k, i] : per-head attention logits; rows 0:H = alpha_dst(i),
        #              rows H:2H = alpha_src(i); att vectors pre-folded into wsd.
        xp = jnp.dot(h, wlin, preferred_element_type=jnp.float32)               # [N, D]
        sd = lax.dot_general(wsd, h, (((0,), (1,)), ((), ())),
                             preferred_element_type=jnp.float32)                # [2H, N]
        a_dst = sd[0:heads]                                                     # [H, N]
        a_src = sd[heads:two_h]                                                 # [H, N]

        # Batched logits for all heads at once: [H, N, N].
        # logits[h, i, j] = alpha_dst[h, i] + alpha_src[h, j] + alpha_edge[h, i, j]
        # (ae_ref already contains the additive -1e30 mask for non-edges.)
        logits = ae_ref[l] + a_dst[:, :, None] + a_src[:, None, :]
        logits = jnp.where(logits > 0, logits, 0.2 * logits)                    # LeakyReLU(0.2)

        # One softmax pass over all heads (softmax over sources j = last axis).
        m = jnp.max(logits, axis=2, keepdims=True)                              # [H, N, 1]
        p = jnp.exp(logits - m)                                                 # exactly 0 off-edges
        s = jnp.sum(p, axis=2, keepdims=True)                                   # [H, N, 1]
        p = p * (1.0 / s)                                                       # exact normalization

        # One aggregation matmul for all heads; head selection and the aggr='mean'
        # degree division are both folded into the precomputed `hm` mask.
        agg = jnp.dot(p.reshape(heads * n, n), xp,
                      preferred_element_type=jnp.float32)                       # [H*N, D]
        contrib = agg * hm                                                      # [H*N, D]
        acc = contrib[0:n, :]
        for hd in range(1, heads):
            acc = acc + contrib[hd * n:(hd + 1) * n, :]                         # [N, D]

        # conv bias + residual (more_skip=True) + ReLU
        h = jnp.maximum(h + acc + bias, 0.0)

    o_ref[...] = h


# ------------------------------- wrappers ---------------------------------- #

def gatc_fused(x, ae_m, cpack):
    n = x.shape[0]
    kernel = functools.partial(gatc_kernel, heads=HEADS, head_dim=HEAD_DIM,
                               n_layers=N_LAYERS)
    return pl.pallas_call(
        kernel,
        out_shape=jax.ShapeDtypeStruct((n, D_MODEL), jnp.float32),
        in_specs=[_VMEM, _VMEM, _VMEM],
        out_specs=_VMEM,
    )(x, ae_m, cpack)


def build_dense_graph(edge_index, edge_attr, num_nodes):
    """JAX glue: sparse edge list -> dense adjacency / edge-feature tensors,
    with self-loops added (fill_value='mean', as in PyG GATConv).
    (Scatter from an edge list has no clean Pallas equivalent; done in XLA.)"""
    row = edge_index[0]   # source j
    col = edge_index[1]   # target i
    ed = edge_attr.shape[1]
    cnt = jnp.zeros((num_nodes,), jnp.float32).at[col].add(1.0)
    asum = jnp.zeros((num_nodes, ed), jnp.float32).at[col].add(edge_attr)
    loop_attr = asum / jnp.maximum(cnt, 1.0)[:, None]
    diag = jnp.arange(num_nodes)
    adj = jnp.zeros((num_nodes, num_nodes), jnp.float32).at[col, row].set(1.0)
    adj = adj.at[diag, diag].set(1.0)
    edge3 = jnp.zeros((num_nodes, num_nodes, ed), jnp.float32)
    edge3 = edge3.at[col, row].set(edge_attr)
    edge3 = edge3.at[diag, diag].set(loop_attr)
    return adj, edge3


def _blockdiag(att):
    """att [H, C] -> block-diagonal [D, H] so xp @ A gives per-head <xp_h, att_h>."""
    eye = jnp.eye(HEADS, dtype=att.dtype)                             # [H, H]
    return (att[:, :, None] * eye[:, None, :]).reshape(HEADS * HEAD_DIM, HEADS)


def _edge_attention_term(edge3, conv_p):
    """Pre-contract the edge-attention term (edge_attr x weight algebra only):
       ae[h, i, j] = sum_c att_edge[h, c] * (lin_edge(e_ij))[h*C + c]  ->  [H, N, N]."""
    wedge = conv_p["wedge"].reshape(EDGE_DIM, HEADS, HEAD_DIM)        # [Ed, H, C]
    v = jnp.einsum("ehc,hc->eh", wedge, conv_p["att_edge"])           # [Ed, H]
    return jnp.einsum("ije,eh->hij", edge3, v)                        # [H, N, N]


def _pack_constants(params, adj, edge3):
    """Pure parameter/graph algebra, done once in XLA: fold attention vectors into
    the node projection, pre-contract the edge term + adjacency mask, and fold
    head-selection + 1/deg (aggr='mean') into one mask. Returns (ae_m, cpack)."""
    n = adj.shape[0]
    convs = [params[f"conv{l}"] for l in (1, 2, 3)]

    # Edge-attention term + additive adjacency mask per layer/head: [L, H, N, N]
    mask_add = (adj - 1.0) * 1e30                                     # 0 on edges, -1e30 off
    ae_m = jnp.stack([_edge_attention_term(edge3, p) + mask_add[None] for p in convs])

    # Head-block mask scaled by 1/deg (aggr='mean'): [H*N, D]
    deg = jnp.sum(adj, axis=1)                                        # >= 1 (self loops)
    inv_deg = 1.0 / deg
    row_h = jnp.repeat(jnp.arange(HEADS), n)                          # [H*N]
    col_h = jnp.repeat(jnp.arange(HEADS), HEAD_DIM)                   # [D]
    hm = (row_h[:, None] == col_h[None, :]).astype(jnp.float32) \
        * jnp.tile(inv_deg, HEADS)[:, None]

    # Single packed constant buffer (one DMA into the kernel).
    cp = jnp.zeros((CP_ROWS, D_MODEL), jnp.float32)
    cp = cp.at[LPW_OFF:LPW_OFF + NODE_FEAT_DIM].set(params["lp_w"])
    cp = cp.at[LPB_OFF].set(params["lp_b"][0])
    for l, p in enumerate(convs):
        wsd = p["wlin"] @ jnp.concatenate(
            [_blockdiag(p["att_dst"]), _blockdiag(p["att_src"])], axis=1)       # [D, 2H]
        cp = cp.at[WLIN_OFF + l * D_MODEL:WLIN_OFF + (l + 1) * D_MODEL].set(p["wlin"])
        cp = cp.at[WSD_OFF + l * D_MODEL:WSD_OFF + (l + 1) * D_MODEL,
                   0:2 * HEADS].set(wsd)
        cp = cp.at[BIAS_OFF + 8 * l].set(p["bias"][0])
    cp = cp.at[HM_OFF:HM_OFF + HEADS * n].set(hm)
    return ae_m, cp


@jax.jit
def gatc_forward(x, edge_index, edge_attr, params):
    n = x.shape[0]
    # TODO(synk): if edge_index/edge_attr are static across steps, hoist/cache
    # (ae_m, cpack) outside the per-step jit; this XLA prep dominates end-to-end.
    adj, edge3 = build_dense_graph(edge_index, edge_attr, n)
    ae_m, cpack = _pack_constants(params, adj, edge3)
    return gatc_fused(x, ae_m, cpack)


def init_params(key):
    keys = jax.random.split(key, 20)
    s = 0.2
    params = {
        "lp_w": s * jax.random.normal(keys[0], (NODE_FEAT_DIM, D_MODEL), jnp.float32),
        "lp_b": s * jax.random.normal(keys[1], (1, D_MODEL), jnp.float32),
    }
    ki = 2
    for l in (1, 2, 3):
        params[f"conv{l}"] = {
            "wlin": s * jax.random.normal(keys[ki + 0], (D_MODEL, HEADS * HEAD_DIM), jnp.float32),
            "att_src": s * jax.random.normal(keys[ki + 1], (HEADS, HEAD_DIM), jnp.float32),
            "att_dst": s * jax.random.normal(keys[ki + 2], (HEADS, HEAD_DIM), jnp.float32),
            "wedge": s * jax.random.normal(keys[ki + 3], (EDGE_DIM, HEADS * HEAD_DIM), jnp.float32),
            "att_edge": s * jax.random.normal(keys[ki + 4], (HEADS, HEAD_DIM), jnp.float32),
            "bias": s * jax.random.normal(keys[ki + 5], (1, HEADS * HEAD_DIM), jnp.float32),
        }
        ki += 6
    return params


if __name__ == "__main__":
    key = jax.random.PRNGKey(0)
    kx, ke, kp = jax.random.split(key, 3)

    # Synthetic graph: 16 nodes, 32 directed edges (ring + skip-3), no self loops.
    x = jax.random.normal(kx, (N_NODES, NODE_FEAT_DIM), jnp.float32)
    src = jnp.concatenate([(jnp.arange(N_NODES) + 1) % N_NODES,
                           (jnp.arange(N_NODES) + 3) % N_NODES])
    dst = jnp.concatenate([jnp.arange(N_NODES), jnp.arange(N_NODES)])
    edge_index = jnp.stack([src, dst]).astype(jnp.int32)
    edge_attr = jax.random.normal(ke, (edge_index.shape[1], EDGE_DIM), jnp.float32)

    params = init_params(kp)
    out = gatc_forward(x, edge_index, edge_attr, params)
    jax.block_until_ready(out)
    assert out.shape == (N_NODES, D_MODEL)
    assert bool(jnp.all(jnp.isfinite(out)))
    print("KERNEL_OK")
</pallas_src>

<mosaic_0001>
module attributes {stable_mosaic.version = 11 : i64} {
  func.func private @main(%arg0: i32) attributes {dimension_semantics = [#tpu.dimension_semantics<core_parallel>], iteration_bounds = array<i64: 2>, tpu.core_type = #tpu.core_type<sc_scalar_subcore>, window_params = []} {
    return
  }
}

module attributes {stable_mosaic.version = 11 : i64} {
  func.func private @main(%arg0: i32) attributes {dimension_semantics = [#tpu.dimension_semantics<core_parallel>], iteration_bounds = array<i64: 2>, tpu.core_type = #tpu.core_type<sc_scalar_subcore>, window_params = []} {
    return
  }
}

module attributes {stable_mosaic.version = 11 : i64} {
  func.func @gatc_kernel(%arg0: memref<16x8xf32, #tpu.memory_space<vmem>>, %arg1: memref<3x4x16x16xf32, #tpu.memory_space<vmem>>, %arg2: memref<296x32xf32, #tpu.memory_space<vmem>>, %arg3: memref<16x32xf32, #tpu.memory_space<vmem>>) attributes {dimension_semantics = [], scalar_prefetch = 0 : i64, scratch_operands = 0 : i64, tpu.core_type = #tpu.core_type<tc>} {
    %c0 = arith.constant 0 : index
    %c0_0 = arith.constant 0 : index
    %0 = vector.load %arg2[%c0, %c0_0] : memref<296x32xf32, #tpu.memory_space<vmem>>, vector<8x32xf32>
    %c8 = arith.constant 8 : index
    %c0_1 = arith.constant 0 : index
    %1 = vector.load %arg2[%c8, %c0_1] : memref<296x32xf32, #tpu.memory_space<vmem>>, vector<1x32xf32>
    %c232 = arith.constant 232 : index
    %c0_2 = arith.constant 0 : index
    %2 = vector.load %arg2[%c232, %c0_2] : memref<296x32xf32, #tpu.memory_space<vmem>>, vector<64x32xf32>
    %c0_3 = arith.constant 0 : index
    %c0_4 = arith.constant 0 : index
    %3 = vector.load %arg0[%c0_3, %c0_4] : memref<16x8xf32, #tpu.memory_space<vmem>>, vector<16x8xf32>
    %cst = arith.constant dense<0.000000e+00> : vector<16x32xf32>
    %4 = tpu.matmul %3, %0, %cst {dimension_numbers = #tpu.dot_dimension_numbers<[1], [0], [0], [1], [0, 0, 1, 1], [], []>} : vector<16x8xf32>, vector<8x32xf32>, vector<16x32xf32> -> vector<16x32xf32>
    %5 = vector.broadcast %1 : vector<1x32xf32> to vector<16x32xf32>
    %6 = arith.addf %4, %5 : vector<16x32xf32>
    %c16 = arith.constant 16 : index
    %c0_5 = arith.constant 0 : index
    %7 = vector.load %arg2[%c16, %c0_5] : memref<296x32xf32, #tpu.memory_space<vmem>>, vector<32x32xf32>
    %c112 = arith.constant 112 : index
    %c0_6 = arith.constant 0 : index
    %8 = vector.load %arg2[%c112, %c0_6] : memref<296x32xf32, #tpu.memory_space<vmem>>, vector<32x8xf32>
    %c208 = arith.constant 208 : index
    %c0_7 = arith.constant 0 : index
    %9 = vector.load %arg2[%c208, %c0_7] : memref<296x32xf32, #tpu.memory_space<vmem>>, vector<1x32xf32>
    %cst_8 = arith.constant dense<0.000000e+00> : vector<16x32xf32>
    %10 = tpu.matmul %6, %7, %cst_8 {dimension_numbers = #tpu.dot_dimension_numbers<[1], [0], [0], [1], [0, 0, 1, 1], [], []>} : vector<16x32xf32>, vector<32x32xf32>, vector<16x32xf32> -> vector<16x32xf32>
    %cst_9 = arith.constant dense<0.000000e+00> : vector<8x16xf32>
    %11 = tpu.matmul %8, %6, %cst_9 {dimension_numbers = #tpu.dot_dimension_numbers<[0], [1], [1], [0], [0, 1, 1, 0], [], []>} : vector<32x8xf32>, vector<16x32xf32>, vector<8x16xf32> -> vector<8x16xf32>
    %12 = vector.extract_strided_slice %11 {offsets = [0, 0], sizes = [4, 16], strides = [1, 1]} : vector<8x16xf32> to vector<4x16xf32>
    %13 = vector.extract_strided_slice %11 {offsets = [4, 0], sizes = [4, 16], strides = [1, 1]} : vector<8x16xf32> to vector<4x16xf32>
    %c0_10 = arith.constant 0 : index
    %c0_11 = arith.constant 0 : index
    %c0_12 = arith.constant 0 : index
    %c0_13 = arith.constant 0 : index
    %14 = vector.load %arg1[%c0_10, %c0_11, %c0_12, %c0_13] : memref<3x4x16x16xf32, #tpu.memory_space<vmem>>, vector<1x4x16x16xf32>
    %15 = vector.shape_cast %14 : vector<1x4x16x16xf32> to vector<4x16x16xf32>
    %16 = vector.shape_cast %12 : vector<4x16xf32> to vector<4x16x1xf32>
    %17 = vector.broadcast %16 : vector<4x16x1xf32> to vector<4x16x16xf32>
    %18 = arith.addf %15, %17 : vector<4x16x16xf32>
    %19 = vector.shape_cast %13 : vector<4x16xf32> to vector<4x1x16xf32>
    %20 = vector.broadcast %19 : vector<4x1x16xf32> to vector<4x16x16xf32>
    %21 = arith.addf %18, %20 : vector<4x16x16xf32>
    %cst_14 = arith.constant 0.000000e+00 : f32
    %22 = vector.broadcast %cst_14 : f32 to vector<4x16x16xf32>
    %23 = arith.cmpf ogt, %21, %22 : vector<4x16x16xf32>
    %cst_15 = arith.constant 2.000000e-01 : f32
    %24 = vector.broadcast %cst_15 : f32 to vector<4x16x16xf32>
    %25 = arith.mulf %24, %21 : vector<4x16x16xf32>
    %26 = arith.select %23, %21, %25 : vector<4x16x16xi1>, vector<4x16x16xf32>
    %cst_16 = arith.constant dense<0xFF800000> : vector<4x16xf32>
    %27 = vector.multi_reduction <maximumf>, %26, %cst_16 [2] : vector<4x16x16xf32> to vector<4x16xf32>
    %28 = vector.shape_cast %27 : vector<4x16xf32> to vector<4x16x1xf32>
    %29 = vector.broadcast %28 : vector<4x16x1xf32> to vector<4x16x16xf32>
    %30 = arith.subf %26, %29 : vector<4x16x16xf32>
    %31 = math.exp %30 : vector<4x16x16xf32>
    %cst_17 = arith.constant dense<0.000000e+00> : vector<4x16xf32>
    %32 = vector.multi_reduction <add>, %31, %cst_17 [2] : vector<4x16x16xf32> to vector<4x16xf32>
    %33 = vector.shape_cast %32 : vector<4x16xf32> to vector<4x16x1xf32>
    %cst_18 = arith.constant 1.000000e+00 : f32
    %34 = vector.broadcast %cst_18 : f32 to vector<4x16x1xf32>
    %35 = arith.divf %34, %33 : vector<4x16x1xf32>
    %36 = vector.broadcast %35 : vector<4x16x1xf32> to vector<4x16x16xf32>
    %37 = arith.mulf %31, %36 : vector<4x16x16xf32>
    %38 = vector.shape_cast %37 : vector<4x16x16xf32> to vector<64x16xf32>
    %cst_19 = arith.constant dense<0.000000e+00> : vector<64x32xf32>
    %39 = tpu.matmul %38, %10, %cst_19 {dimension_numbers = #tpu.dot_dimension_numbers<[1], [0], [0], [1], [0, 0, 1, 1], [], []>} : vector<64x16xf32>, vector<16x32xf32>, vector<64x32xf32> -> vector<64x32xf32>
    %40 = arith.mulf %39, %2 : vector<64x32xf32>
    %41 = vector.extract_strided_slice %40 {offsets = [0, 0], sizes = [16, 32], strides = [1, 1]} : vector<64x32xf32> to vector<16x32xf32>
    %42 = vector.extract_strided_slice %40 {offsets = [16, 0], sizes = [16, 32], strides = [1, 1]} : vector<64x32xf32> to vector<16x32xf32>
    %43 = arith.addf %41, %42 : vector<16x32xf32>
    %44 = vector.extract_strided_slice %40 {offsets = [32, 0], sizes = [16, 32], strides = [1, 1]} : vector<64x32xf32> to vector<16x32xf32>
    %45 = arith.addf %43, %44 : vector<16x32xf32>
    %46 = vector.extract_strided_slice %40 {offsets = [48, 0], sizes = [16, 32], strides = [1, 1]} : vector<64x32xf32> to vector<16x32xf32>
    %47 = arith.addf %45, %46 : vector<16x32xf32>
    %48 = arith.addf %6, %47 : vector<16x32xf32>
    %49 = vector.broadcast %9 : vector<1x32xf32> to vector<16x32xf32>
    %50 = arith.addf %48, %49 : vector<16x32xf32>
    %cst_20 = arith.constant 0.000000e+00 : f32
    %51 = vector.broadcast %cst_20 : f32 to vector<16x32xf32>
    %52 = arith.maximumf %50, %51 : vector<16x32xf32>
    %c48 = arith.constant 48 : index
    %c0_21 = arith.constant 0 : index
    %53 = vector.load %arg2[%c48, %c0_21] : memref<296x32xf32, #tpu.memory_space<vmem>>, vector<32x32xf32>
    %c144 = arith.constant 144 : index
    %c0_22 = arith.constant 0 : index
    %54 = vector.load %arg2[%c144, %c0_22] : memref<296x32xf32, #tpu.memory_space<vmem>>, vector<32x8xf32>
    %c216 = arith.constant 216 : index
    %c0_23 = arith.constant 0 : index
    %55 = vector.load %arg2[%c216, %c0_23] : memref<296x32xf32, #tpu.memory_space<vmem>>, vector<1x32xf32>
    %cst_24 = arith.constant dense<0.000000e+00> : vector<16x32xf32>
    %56 = tpu.matmul %52, %53, %cst_24 {dimension_numbers = #tpu.dot_dimension_numbers<[1], [0], [0], [1], [0, 0, 1, 1], [], []>} : vector<16x32xf32>, vector<32x32xf32>, vector<16x32xf32> -> vector<16x32xf32>
    %cst_25 = arith.constant dense<0.000000e+00> : vector<8x16xf32>
    %57 = tpu.matmul %54, %52, %cst_25 {dimension_numbers = #tpu.dot_dimension_numbers<[0], [1], [1], [0], [0, 1, 1, 0], [], []>} : vector<32x8xf32>, vector<16x32xf32>, vector<8x16xf32> -> vector<8x16xf32>
    %58 = vector.extract_strided_slice %57 {offsets = [0, 0], sizes = [4, 16], strides = [1, 1]} : vector<8x16xf32> to vector<4x16xf32>
    %59 = vector.extract_strided_slice %57 {offsets = [4, 0], sizes = [4, 16], strides = [1, 1]} : vector<8x16xf32> to vector<4x16xf32>
    %c1 = arith.constant 1 : index
    %c0_26 = arith.constant 0 : index
    %c0_27 = arith.constant 0 : index
    %c0_28 = arith.constant 0 : index
    %60 = vector.load %arg1[%c1, %c0_26, %c0_27, %c0_28] : memref<3x4x16x16xf32, #tpu.memory_space<vmem>>, vector<1x4x16x16xf32>
    %61 = vector.shape_cast %60 : vector<1x4x16x16xf32> to vector<4x16x16xf32>
    %62 = vector.shape_cast %58 : vector<4x16xf32> to vector<4x16x1xf32>
    %63 = vector.broadcast %62 : vector<4x16x1xf32> to vector<4x16x16xf32>
    %64 = arith.addf %61, %63 : vector<4x16x16xf32>
    %65 = vector.shape_cast %59 : vector<4x16xf32> to vector<4x1x16xf32>
    %66 = vector.broadcast %65 : vector<4x1x16xf32> to vector<4x16x16xf32>
    %67 = arith.addf %64, %66 : vector<4x16x16xf32>
    %cst_29 = arith.constant 0.000000e+00 : f32
    %68 = vector.broadcast %cst_29 : f32 to vector<4x16x16xf32>
    %69 = arith.cmpf ogt, %67, %68 : vector<4x16x16xf32>
    %cst_30 = arith.constant 2.000000e-01 : f32
    %70 = vector.broadcast %cst_30 : f32 to vector<4x16x16xf32>
    %71 = arith.mulf %70, %67 : vector<4x16x16xf32>
    %72 = arith.select %69, %67, %71 : vector<4x16x16xi1>, vector<4x16x16xf32>
    %cst_31 = arith.constant dense<0xFF800000> : vector<4x16xf32>
    %73 = vector.multi_reduction <maximumf>, %72, %cst_31 [2] : vector<4x16x16xf32> to vector<4x16xf32>
    %74 = vector.shape_cast %73 : vector<4x16xf32> to vector<4x16x1xf32>
    %75 = vector.broadcast %74 : vector<4x16x1xf32> to vector<4x16x16xf32>
    %76 = arith.subf %72, %75 : vector<4x16x16xf32>
    %77 = math.exp %76 : vector<4x16x16xf32>
    %cst_32 = arith.constant dense<0.000000e+00> : vector<4x16xf32>
    %78 = vector.multi_reduction <add>, %77, %cst_32 [2] : vector<4x16x16xf32> to vector<4x16xf32>
    %79 = vector.shape_cast %78 : vector<4x16xf32> to vector<4x16x1xf32>
    %cst_33 = arith.constant 1.000000e+00 : f32
    %80 = vector.broadcast %cst_33 : f32 to vector<4x16x1xf32>
    %81 = arith.divf %80, %79 : vector<4x16x1xf32>
    %82 = vector.broadcast %81 : vector<4x16x1xf32> to vector<4x16x16xf32>
    %83 = arith.mulf %77, %82 : vector<4x16x16xf32>
    %84 = vector.shape_cast %83 : vector<4x16x16xf32> to vector<64x16xf32>
    %cst_34 = arith.constant dense<0.000000e+00> : vector<64x32xf32>
    %85 = tpu.matmul %84, %56, %cst_34 {dimension_numbers = #tpu.dot_dimension_numbers<[1], [0], [0], [1], [0, 0, 1, 1], [], []>} : vector<64x16xf32>, vector<16x32xf32>, vector<64x32xf32> -> vector<64x32xf32>
    %86 = arith.mulf %85, %2 : vector<64x32xf32>
    %87 = vector.extract_strided_slice %86 {offsets = [0, 0], sizes = [16, 32], strides = [1, 1]} : vector<64x32xf32> to vector<16x32xf32>
    %88 = vector.extract_strided_slice %86 {offsets = [16, 0], sizes = [16, 32], strides = [1, 1]} : vector<64x32xf32> to vector<16x32xf32>
    %89 = arith.addf %87, %88 : vector<16x32xf32>
    %90 = vector.extract_strided_slice %86 {offsets = [32, 0], sizes = [16, 32], strides = [1, 1]} : vector<64x32xf32> to vector<16x32xf32>
    %91 = arith.addf %89, %90 : vector<16x32xf32>
    %92 = vector.extract_strided_slice %86 {offsets = [48, 0], sizes = [16, 32], strides = [1, 1]} : vector<64x32xf32> to vector<16x32xf32>
    %93 = arith.addf %91, %92 : vector<16x32xf32>
    %94 = arith.addf %52, %93 : vector<16x32xf32>
    %95 = vector.broadcast %55 : vector<1x32xf32> to vector<16x32xf32>
    %96 = arith.addf %94, %95 : vector<16x32xf32>
    %cst_35 = arith.constant 0.000000e+00 : f32
    %97 = vector.broadcast %cst_35 : f32 to vector<16x32xf32>
    %98 = arith.maximumf %96, %97 : vector<16x32xf32>
    %c80 = arith.constant 80 : index
    %c0_36 = arith.constant 0 : index
    %99 = vector.load %arg2[%c80, %c0_36] : memref<296x32xf32, #tpu.memory_space<vmem>>, vector<32x32xf32>
    %c176 = arith.constant 176 : index
    %c0_37 = arith.constant 0 : index
    %100 = vector.load %arg2[%c176, %c0_37] : memref<296x32xf32, #tpu.memory_space<vmem>>, vector<32x8xf32>
    %c224 = arith.constant 224 : index
    %c0_38 = arith.constant 0 : index
    %101 = vector.load %arg2[%c224, %c0_38] : memref<296x32xf32, #tpu.memory_space<vmem>>, vector<1x32xf32>
    %cst_39 = arith.constant dense<0.000000e+00> : vector<16x32xf32>
    %102 = tpu.matmul %98, %99, %cst_39 {dimension_numbers = #tpu.dot_dimension_numbers<[1], [0], [0], [1], [0, 0, 1, 1], [], []>} : vector<16x32xf32>, vector<32x32xf32>, vector<16x32xf32> -> vector<16x32xf32>
    %cst_40 = arith.constant dense<0.000000e+00> : vector<8x16xf32>
    %103 = tpu.matmul %100, %98, %cst_40 {dimension_numbers = #tpu.dot_dimension_numbers<[0], [1], [1], [0], [0, 1, 1, 0], [], []>} : vector<32x8xf32>, vector<16x32xf32>, vector<8x16xf32> -> vector<8x16xf32>
    %104 = vector.extract_strided_slice %103 {offsets = [0, 0], sizes = [4, 16], strides = [1, 1]} : vector<8x16xf32> to vector<4x16xf32>
    %105 = vector.extract_strided_slice %103 {offsets = [4, 0], sizes = [4, 16], strides = [1, 1]} : vector<8x16xf32> to vector<4x16xf32>
    %c2 = arith.constant 2 : index
    %c0_41 = arith.constant 0 : index
    %c0_42 = arith.constant 0 : index
    %c0_43 = arith.constant 0 : index
    %106 = vector.load %arg1[%c2, %c0_41, %c0_42, %c0_43] : memref<3x4x16x16xf32, #tpu.memory_space<vmem>>, vector<1x4x16x16xf32>
    %107 = vector.shape_cast %106 : vector<1x4x16x16xf32> to vector<4x16x16xf32>
    %108 = vector.shape_cast %104 : vector<4x16xf32> to vector<4x16x1xf32>
    %109 = vector.broadcast %108 : vector<4x16x1xf32> to vector<4x16x16xf32>
    %110 = arith.addf %107, %109 : vector<4x16x16xf32>
    %111 = vector.shape_cast %105 : vector<4x16xf32> to vector<4x1x16xf32>
    %112 = vector.broadcast %111 : vector<4x1x16xf32> to vector<4x16x16xf32>
    %113 = arith.addf %110, %112 : vector<4x16x16xf32>
    %cst_44 = arith.constant 0.000000e+00 : f32
    %114 = vector.broadcast %cst_44 : f32 to vector<4x16x16xf32>
    %115 = arith.cmpf ogt, %113, %114 : vector<4x16x16xf32>
    %cst_45 = arith.constant 2.000000e-01 : f32
    %116 = vector.broadcast %cst_45 : f32 to vector<4x16x16xf32>
    %117 = arith.mulf %116, %113 : vector<4x16x16xf32>
    %118 = arith.select %115, %113, %117 : vector<4x16x16xi1>, vector<4x16x16xf32>
    %cst_46 = arith.constant dense<0xFF800000> : vector<4x16xf32>
    %119 = vector.multi_reduction <maximumf>, %118, %cst_46 [2] : vector<4x16x16xf32> to vector<4x16xf32>
    %120 = vector.shape_cast %119 : vector<4x16xf32> to vector<4x16x1xf32>
    %121 = vector.broadcast %120 : vector<4x16x1xf32> to vector<4x16x16xf32>
    %122 = arith.subf %118, %121 : vector<4x16x16xf32>
    %123 = math.exp %122 : vector<4x16x16xf32>
    %cst_47 = arith.constant dense<0.000000e+00> : vector<4x16xf32>
    %124 = vector.multi_reduction <add>, %123, %cst_47 [2] : vector<4x16x16xf32> to vector<4x16xf32>
    %125 = vector.shape_cast %124 : vector<4x16xf32> to vector<4x16x1xf32>
    %cst_48 = arith.constant 1.000000e+00 : f32
    %126 = vector.broadcast %cst_48 : f32 to vector<4x16x1xf32>
    %127 = arith.divf %126, %125 : vector<4x16x1xf32>
    %128 = vector.broadcast %127 : vector<4x16x1xf32> to vector<4x16x16xf32>
    %129 = arith.mulf %123, %128 : vector<4x16x16xf32>
    %130 = vector.shape_cast %129 : vector<4x16x16xf32> to vector<64x16xf32>
    %cst_49 = arith.constant dense<0.000000e+00> : vector<64x32xf32>
    %131 = tpu.matmul %130, %102, %cst_49 {dimension_numbers = #tpu.dot_dimension_numbers<[1], [0], [0], [1], [0, 0, 1, 1], [], []>} : vector<64x16xf32>, vector<16x32xf32>, vector<64x32xf32> -> vector<64x32xf32>
    %132 = arith.mulf %131, %2 : vector<64x32xf32>
    %133 = vector.extract_strided_slice %132 {offsets = [0, 0], sizes = [16, 32], strides = [1, 1]} : vector<64x32xf32> to vector<16x32xf32>
    %134 = vector.extract_strided_slice %132 {offsets = [16, 0], sizes = [16, 32], strides = [1, 1]} : vector<64x32xf32> to vector<16x32xf32>
    %135 = arith.addf %133, %134 : vector<16x32xf32>
    %136 = vector.extract_strided_slice %132 {offsets = [32, 0], sizes = [16, 32], strides = [1, 1]} : vector<64x32xf32> to vector<16x32xf32>
    %137 = arith.addf %135, %136 : vector<16x32xf32>
    %138 = vector.extract_strided_slice %132 {offsets = [48, 0], sizes = [16, 32], strides = [1, 1]} : vector<64x32xf32> to vector<16x32xf32>
    %139 = arith.addf %137, %138 : vector<16x32xf32>
    %140 = arith.addf %98, %139 : vector<16x32xf32>
    %141 = vector.broadcast %101 : vector<1x32xf32> to vector<16x32xf32>
    %142 = arith.addf %140, %141 : vector<16x32xf32>
    %cst_50 = arith.constant 0.000000e+00 : f32
    %143 = vector.broadcast %cst_50 : f32 to vector<16x32xf32>
    %144 = arith.maximumf %142, %143 : vector<16x32xf32>
    %c0_51 = arith.constant 0 : index
    %c0_52 = arith.constant 0 : index
    %145 = vector.load %arg3[%c0_51, %c0_52] : memref<16x32xf32, #tpu.memory_space<vmem>>, vector<16x32xf32>
    tpu.vector_store %arg3[%c0_51, %c0_52], %144 {strides = array<i32>} : memref<16x32xf32, #tpu.memory_space<vmem>>, vector<16x32xf32>,
    return
  }
}

</mosaic_0001>

<llo_original>
// kernel: tile.8
$region0: #{tile.8}
  #allocation0 [shape = 's32[1]{0}', space=sflag, size = 0x4, scoped, tag = 'scoped memory for tile.8']
  %s0 = inlined_call_operand.vmem [shape: f32[16], index: 0, kind: input, shape index: {}]
  %s1 = inlined_call_operand.vmem [shape: f32[4,16], index: 1, kind: output, shape index: {}]
  // Predicated region
  $region2: #{tile.8} parent=0 // pred_check
    _
  $region3: #{tile.8} parent=0 // pred_check_branch
    %3 = sbr.rel (0) target = $region5
  $region4: #{tile.8} parent=0 // pred_region
    _
  $region5: #{tile.8} parent=0 // pred_fallthru
    _
  %v4 = vld [vmem:[%s0] ss:$0 sm:$0xff]
  %5 = vst [vmem:[%s1] sm:$0xf] %v4

// kernel: mul.51
$region0: #{mul.51}
  %s0 = inlined_call_operand.vmem [shape: f32[4,16], index: 0, kind: input, shape index: {}]
  %s1 = inlined_call_operand.vmem [shape: f32[64], index: 1, kind: output, shape index: {}]
  $region1: #{mul.51} parent=0
    #allocation0 [shape = 'u8[4096]{0}', space=vmem, size = 0x1000, scoped, tag = 'scoped mem for output reshape']
    #allocation1 [shape = 'u8[4096]{0}', space=vmem, size = 0x1000, scoped, tag = 'scoped mem for input reshape']
    %s3 = sshllo.u32 0, 4
    %v4 = vld [vmem:[%s0] sm:%s3]
    %5 = vst [vmem:[#allocation1] sm:%s3] %v4
    %v6 = vld [vmem:[#allocation1] sm:$0x1]
    %vm7 = vcmask 130048
    %8 = vst.msk [vmem:[#allocation0] sm:$0x1] %vm7, %v6
    %s9 = scalar_lea.vmem [#allocation1], 3
    %v10 = vld [vmem:[%s9] sm:$0x1]
    %11 = vrot.lane.b32.xlu0 %v10, 48
    %v12 = vpop.permute.xlu0 %11
    %vm13 = vcmask 523648
    %14 = vst.msk [vmem:[#allocation0] sm:$0x1] %vm13, %v12
    %s15 = scalar_lea.vmem [#allocation1], 2
    %v16 = vld [vmem:[%s15] sm:$0x1]
    %17 = vrot.lane.b32.xlu0 %v16, 32
    %v18 = vpop.permute.xlu0 %17
    %vm19 = vcmask 392448
    %20 = vst.msk [vmem:[#allocation0] sm:$0x1] %vm19, %v18
    %s21 = scalar_lea.vmem [#allocation1], 1
    %v22 = vld [vmem:[%s21] sm:$0x1]
    %23 = vrot.lane.b32.xlu0 %v22, 16
    %v24 = vpop.permute.xlu0 %23
    %vm25 = vcmask 261248
    %26 = vst.msk [vmem:[#allocation0] sm:$0x1] %vm25, %v24
    %s28 = sshllo.u32 0, 1
    %v30 = vld [vmem:[#allocation0] sm:%s28]
    %s31 = sshllo.u32 0, 1
    %32 = vst [vmem:[%s1] sm:%s31] %v30

// kernel: eq.14
$region0: #{eq.14}
  %s0 = inlined_call_operand.vmem [shape: s32[4,16], index: 0, kind: input, shape index: {}]
  %s1 = inlined_call_operand.vmem [shape: s32[64], index: 1, kind: output, shape index: {}]
  $region1: #{eq.14} parent=0
    #allocation0 [shape = 'u8[4096]{0}', space=vmem, size = 0x1000, scoped, tag = 'scoped mem for output reshape']
    #allocation1 [shape = 'u8[4096]{0}', space=vmem, size = 0x1000, scoped, tag = 'scoped mem for input reshape']
    %s3 = sshllo.u32 0, 4
    %v4 = vld [vmem:[%s0] sm:%s3]
    %5 = vst [vmem:[#allocation1] sm:%s3] %v4
    %v6 = vld [vmem:[#allocation1] sm:$0x1]
    %vm7 = vcmask 130048
    %8 = vst.msk [vmem:[#allocation0] sm:$0x1] %vm7, %v6
    %s9 = scalar_lea.vmem [#allocation1], 3
    %v10 = vld [vmem:[%s9] sm:$0x1]
    %11 = vrot.lane.b32.xlu0 %v10, 48
    %v12 = vpop.permute.xlu0 %11
    %vm13 = vcmask 523648
    %14 = vst.msk [vmem:[#allocation0] sm:$0x1] %vm13, %v12
    %s15 = scalar_lea.vmem [#allocation1], 2
    %v16 = vld [vmem:[%s15] sm:$0x1]
    %17 = vrot.lane.b32.xlu0 %v16, 32
    %v18 = vpop.permute.xlu0 %17
    %vm19 = vcmask 392448
    %20 = vst.msk [vmem:[#allocation0] sm:$0x1] %vm19, %v18
    %s21 = scalar_lea.vmem [#allocation1], 1
    %v22 = vld [vmem:[%s21] sm:$0x1]
    %23 = vrot.lane.b32.xlu0 %v22, 16
    %v24 = vpop.permute.xlu0 %23
    %vm25 = vcmask 261248
    %26 = vst.msk [vmem:[#allocation0] sm:$0x1] %vm25, %v24
    %s28 = sshllo.u32 0, 1
    %v30 = vld [vmem:[#allocation0] sm:%s28]
    %s31 = sshllo.u32 0, 1
    %32 = vst [vmem:[%s1] sm:%s31] %v30

// kernel: eq.17
$region0: #{eq.17}
  %s0 = inlined_call_operand.vmem [shape: s32[4,8], index: 0, kind: input, shape index: {}]
  %s1 = inlined_call_operand.vmem [shape: s32[32], index: 1, kind: output, shape index: {}]
  $region1: #{eq.17} parent=0
    #allocation0 [shape = 'u8[4096]{0}', space=vmem, size = 0x1000, scoped, tag = 'scoped mem for output reshape']
    #allocation1 [shape = 'u8[4096]{0}', space=vmem, size = 0x1000, scoped, tag = 'scoped mem for input reshape']
    %s3 = sshllo.u32 0, 4
    %v4 = vld [vmem:[%s0] sm:%s3]
    %5 = vst [vmem:[#allocation1] sm:%s3] %v4
    %v6 = vld [vmem:[#allocation1] sm:$0x1]
    %vm7 = vcmask 64512
    %8 = vst.msk [vmem:[#allocation0] sm:$0x1] %vm7, %v6
    %s9 = scalar_lea.vmem [#allocation1], 3
    %v10 = vld [vmem:[%s9] sm:$0x1]
    %11 = vrot.lane.b32.xlu0 %v10, 24
    %v12 = vpop.permute.xlu0 %11
    %vm13 = vcmask 261312
    %14 = vst.msk [vmem:[#allocation0] sm:$0x1] %vm13, %v12
    %s15 = scalar_lea.vmem [#allocation1], 2
    %v16 = vld [vmem:[%s15] sm:$0x1]
    %17 = vrot.lane.b32.xlu0 %v16, 16
    %v18 = vpop.permute.xlu0 %17
    %vm19 = vcmask 195712
    %20 = vst.msk [vmem:[#allocation0] sm:$0x1] %vm19, %v18
    %s21 = scalar_lea.vmem [#allocation1], 1
    %v22 = vld [vmem:[%s21] sm:$0x1]
    %23 = vrot.lane.b32.xlu0 %v22, 8
    %v24 = vpop.permute.xlu0 %23
    %vm25 = vcmask 130112
    %26 = vst.msk [vmem:[#allocation0] sm:$0x1] %vm25, %v24
    %s28 = sshllo.u32 0, 1
    %v30 = vld [vmem:[#allocation0] sm:%s28]
    %s31 = sshllo.u32 0, 1
    %32 = vst [vmem:[%s1] sm:%s31] %v30

// kernel: gatc_forward.1
$region0: #{gatc_forward.1}
  #allocation0 [shape = 'u32[]', space=smem, size = 0x4, offset = 0x4, fixed_abs, tag = 'smem constant byte address 0x4 - core index']
  #allocation1 [shape = 'u32[144,128]{1,0:T(1,128)}', space=vmem, size = 0x12000, scoped, tag = 'internal scratch']
  %s0 = inlined_call_operand.vmem [shape: f32[16,8], index: 0, kind: input, shape index: {}]
  %s1 = inlined_call_operand.vmem [shape: f32[3,4,16,16], index: 1, kind: input, shape index: {}]
  %s2 = inlined_call_operand.vmem [shape: f32[296,32], index: 2, kind: input, shape index: {}]
  %s3 = inlined_call_operand.hbm [shape: f32[16,32], index: 3, kind: output, shape index: {}]
  %s4 = sld [smem:[#allocation0]]
  $region22: #{gatc_forward.1} parent=0
    _
  %s6 = ssub.s32 1, %s4
  %s7 = scalar_select 0, %s6, %s4
  $region1: #{gatc_forward.1} parent=0
    #allocation2 [shape = 'u8[8192]{0}', space=vmem, size = 0x2000, scoped, tag = 'output window, operand 0, single buffered']
    #allocation3 [shape = 's32[1]{0}', space=sflag, size = 0x4, scoped, tag = 'scoped memory for gatc_forward.1']
    %8 = vsyncpa [#allocation3], 0
    // Predicated region
    $region2: #{gatc_forward.1} parent=1 // pred_check
      _
    $region3: #{gatc_forward.1} parent=1 // pred_check_branch
      %10 = sbr.rel (0) target = $region5
    $region4: #{gatc_forward.1} parent=1 // pred_region
      _
    $region5: #{gatc_forward.1} parent=1 // pred_fallthru
      _
    // Predicated region
    $region6: #{gatc_forward.1} parent=1 // pred_check
      _
    $region7: #{gatc_forward.1} parent=1 // pred_check_branch
      %12 = sbr.rel (0) target = $region9
    $region8: #{gatc_forward.1} parent=1 // pred_region
      _
    $region9: #{gatc_forward.1} parent=1 // pred_fallthru
      _
    // Predicated region
    $region10: #{gatc_forward.1} parent=1 // pred_check
      _
    $region11: #{gatc_forward.1} parent=1 // pred_check_branch
      %14 = sbr.rel (0) target = $region13
    $region12: #{gatc_forward.1} parent=1 // pred_region
      _
    $region13: #{gatc_forward.1} parent=1 // pred_fallthru
      _
    %v15 = vld [vmem:[%s2] sm:$0xff]
    %v16 = vld [vmem:[%s2 + $0x8] sm:$0x1]
    %v17 = vld [vmem:[%s2 + $0xe8] sm:$0xff]
    %v18 = vld [vmem:[%s2 + $0xf0] sm:$0xff]
    %v19 = vld [vmem:[%s2 + $0xf8] sm:$0xff]
    %v20 = vld [vmem:[%s2 + $0x100] sm:$0xff]
    %v21 = vld [vmem:[%s2 + $0x108] sm:$0xff]
    %v22 = vld [vmem:[%s2 + $0x110] sm:$0xff]
    %v23 = vld [vmem:[%s2 + $0x118] sm:$0xff]
    %v24 = vld [vmem:[%s2 + $0x120] sm:$0xff]
    %v25 = vld [vmem:[%s0] sm:$0xff]
    %v26 = vld [vmem:[%s0 + $0x8] sm:$0xff]
    %v27 = vlaneseq
    %v28 = vshrl.u32 %v27, 7
    %v29 = vsub.s32 0, %v28
    %v30 = vrot.slane %v16, %v29
    %vm31 = vcmask 64512
    %v33 = vsel %vm31, %v25, 0
    %v36 = vsel %vm31, %v26, 0
    %38 = vmatprep.subr.mxu0 0.0
    %39 = vmatpush1.msra.mxu0 %v15
    %40 = vmatprep.subr.mxu0 0.0
    %41 = vmatpush1.msra.mxu0 0.0
    %42 = vmatprep.subr.mxu0 0.0
    %43 = vmatpush1.msra.mxu0 0.0
    %44 = vmatprep.subr.mxu0 0.0
    %45 = vmatpush1.msra.mxu0 0.0
    %46 = vmatprep.subr.mxu0 0.0
    %47 = vmatpush1.msra.mxu0 0.0
    %48 = vmatprep.subr.mxu0 0.0
    %49 = vmatpush1.msra.mxu0 0.0
    %50 = vmatprep.subr.mxu0 0.0
    %51 = vmatpush1.msra.mxu0 0.0
    %52 = vmatprep.subr.mxu0 0.0
    %53 = vmatpush1.msra.mxu0 0.0
    %54 = vmatprep.subr.mxu0 0.0
    %55 = vmatpush1.msra.mxu0 0.0
    %56 = vmatprep.subr.mxu0 0.0
    %57 = vmatpush1.msra.mxu0 0.0
    %58 = vmatprep.subr.mxu0 0.0
    %59 = vmatpush1.msra.mxu0 0.0
    %60 = vmatprep.subr.mxu0 0.0
    %61 = vmatpush1.msra.mxu0 0.0
    %62 = vmatprep.subr.mxu0 0.0
    %63 = vmatpush1.msra.mxu0 0.0
    %64 = vmatprep.subr.mxu0 0.0
    %65 = vmatpush1.msra.mxu0 0.0
    %66 = vmatprep.subr.mxu0 0.0
    %67 = vmatpush1.msra.mxu0 0.0
    %68 = vmatprep.subr.mxu0 0.0
    %69 = vmatpush1.msra.mxu0 0.0
    %70 = vmatprep.subr.mxu0 0.0
    %71 = vmatpush1.msra.mxu0 0.0
    %72 = vmatprep.subr.mxu0 0.0
    %73 = vmatpush1.msra.mxu0 0.0
    %74 = vmatprep.subr.mxu0 0.0
    %75 = vmatpush1.msra.mxu0 0.0
    %76 = vmatprep.subr.mxu0 0.0
    %77 = vmatpush1.msra.mxu0 0.0
    %78 = vmatprep.subr.mxu0 0.0
    %79 = vmatpush1.msra.mxu0 0.0
    %80 = vmatprep.subr.mxu0 0.0
    %81 = vmatpush1.msra.mxu0 0.0
    %82 = vmatprep.subr.mxu0 0.0
    %83 = vmatpush1.msra.mxu0 0.0
    %84 = vmatprep.subr.mxu0 0.0
    %85 = vmatpush1.msra.mxu0 0.0
    %86 = vmatprep.subr.mxu0 0.0
    %87 = vmatpush1.msra.mxu0 0.0
    %88 = vmatprep.subr.mxu0 0.0
    %89 = vmatpush1.msra.mxu0 0.0
    %90 = vmatprep.subr.mxu0 0.0
    %91 = vmatpush1.msra.mxu0 0.0
    %92 = vmatprep.subr.mxu0 0.0
    %93 = vmatpush1.msra.mxu0 0.0
    %94 = vmatprep.subr.mxu0 0.0
    %95 = vmatpush1.msra.mxu0 0.0
    %96 = vmatprep.subr.mxu0 0.0
    %97 = vmatpush1.msra.mxu0 0.0
    %98 = vmatprep.subr.mxu0 0.0
    %99 = vmatpush1.msra.mxu0 0.0
    %100 = vmatprep.subr.mxu0 0.0
    %101 = vmatpush1.msra.mxu0 0.0
    %102 = vmatprep.mubr.f32.mxu0 0.0
    %103 = vmatmul.mubr.f32.gmra.mrb[0].mxu0 %v33
    %v104 = vpop.f32.mrb[0].mxu0
    %v105 = vadd.f32 %v30, %v104
    %v106 = vpop.f32.mrb[0].mxu0
    %107 = vmatprep.mubr.f32.mxu0 0.0
    %108 = vmatmul.mubr.f32.gmra.mrb[0].mxu0 %v36
    %v109 = vpop.f32.mrb[0].mxu0
    %v110 = vadd.f32 %v30, %v109
    %v111 = vpop.f32.mrb[0].mxu0
    %112 = vdwg.mxu0
    %v113 = vld [vmem:[%s2 + $0x10] sm:$0xff]
    %v114 = vld [vmem:[%s2 + $0x18] sm:$0xff]
    %v115 = vld [vmem:[%s2 + $0x20] sm:$0xff]
    %v116 = vld [vmem:[%s2 + $0x28] sm:$0xff]
    %v117 = vld [vmem:[%s2 + $0x70] sm:$0xff]
    %v118 = vld [vmem:[%s2 + $0x78] sm:$0xff]
    %v119 = vld [vmem:[%s2 + $0x80] sm:$0xff]
    %v120 = vld [vmem:[%s2 + $0x88] sm:$0xff]
    %v121 = vld [vmem:[%s2 + $0xd0] sm:$0x1]
    %vm122 = vcmask 261120
    %v124 = vsel %vm122, %v105, 0
    %v127 = vsel %vm122, %v110, 0
    %129 = vmatprep.subr.mxu0 0.0
    %130 = vmatpush1.msra.mxu0 %v113
    %131 = vmatprep.subr.mxu0 0.0
    %132 = vmatpush1.msra.mxu0 %v114
    %133 = vmatprep.subr.mxu0 0.0
    %134 = vmatpush1.msra.mxu0 %v115
    %135 = vmatprep.subr.mxu0 0.0
    %136 = vmatpush1.msra.mxu0 %v116
    %137 = vmatprep.subr.mxu0 0.0
    %138 = vmatpush1.msra.mxu0 0.0
    %139 = vmatprep.subr.mxu0 0.0
    %140 = vmatpush1.msra.mxu0 0.0
    %141 = vmatprep.subr.mxu0 0.0
    %142 = vmatpush1.msra.mxu0 0.0
    %143 = vmatprep.subr.mxu0 0.0
    %144 = vmatpush1.msra.mxu0 0.0
    %145 = vmatprep.subr.mxu0 0.0
    %146 = vmatpush1.msra.mxu0 0.0
    %147 = vmatprep.subr.mxu0 0.0
    %148 = vmatpush1.msra.mxu0 0.0
    %149 = vmatprep.subr.mxu0 0.0
    %150 = vmatpush1.msra.mxu0 0.0
    %151 = vmatprep.subr.mxu0 0.0
    %152 = vmatpush1.msra.mxu0 0.0
    %153 = vmatprep.subr.mxu0 0.0
    %154 = vmatpush1.msra.mxu0 0.0
    %155 = vmatprep.subr.mxu0 0.0
    %156 = vmatpush1.msra.mxu0 0.0
    %157 = vmatprep.subr.mxu0 0.0
    %158 = vmatpush1.msra.mxu0 0.0
    %159 = vmatprep.subr.mxu0 0.0
    %160 = vmatpush1.msra.mxu0 0.0
    %161 = vmatprep.subr.mxu0 0.0
    %162 = vmatpush1.msra.mxu0 0.0
    %163 = vmatprep.subr.mxu0 0.0
    %164 = vmatpush1.msra.mxu0 0.0
    %165 = vmatprep.subr.mxu0 0.0
    %166 = vmatpush1.msra.mxu0 0.0
    %167 = vmatprep.subr.mxu0 0.0
    %168 = vmatpush1.msra.mxu0 0.0
    %169 = vmatprep.subr.mxu0 0.0
    %170 = vmatpush1.msra.mxu0 0.0
    %171 = vmatprep.subr.mxu0 0.0
    %172 = vmatpush1.msra.mxu0 0.0
    %173 = vmatprep.subr.mxu0 0.0
    %174 = vmatpush1.msra.mxu0 0.0
    %175 = vmatprep.subr.mxu0 0.0
    %176 = vmatpush1.msra.mxu0 0.0
    %177 = vmatprep.subr.mxu0 0.0
    %178 = vmatpush1.msra.mxu0 0.0
    %179 = vmatprep.subr.mxu0 0.0
    %180 = vmatpush1.msra.mxu0 0.0
    %181 = vmatprep.subr.mxu0 0.0
    %182 = vmatpush1.msra.mxu0 0.0
    %183 = vmatprep.subr.mxu0 0.0
    %184 = vmatpush1.msra.mxu0 0.0
    %185 = vmatprep.subr.mxu0 0.0
    %186 = vmatpush1.msra.mxu0 0.0
    %187 = vmatprep.subr.mxu0 0.0
    %188 = vmatpush1.msra.mxu0 0.0
    %189 = vmatprep.subr.mxu0 0.0
    %190 = vmatpush1.msra.mxu0 0.0
    %191 = vmatprep.subr.mxu0 0.0
    %192 = vmatpush1.msra.mxu0 0.0
    %193 = vmatprep.mubr.f32.mxu0 0.0
    %194 = vmatmul.mubr.f32.gmra.mrb[0].mxu0 %v124
    %v195 = vpop.f32.mrb[0].mxu0
    %v196 = vadd.f32 0.0, %v195
    %v197 = vpop.f32.mrb[0].mxu0
    %198 = vmatprep.mubr.f32.mxu0 0.0
    %199 = vmatmul.mubr.f32.gmra.mrb[0].mxu0 %v127
    %v200 = vpop.f32.mrb[0].mxu0
    %v201 = vadd.f32 0.0, %v200
    %v202 = vpop.f32.mrb[0].mxu0
    %203 = vdwg.mxu0
    %204 = vxpose.xlu0.b32.start [1/16] %v117, 128
    %205 = vxpose.xlu0.b32.cont [2/16] %v118, 128
    %206 = vxpose.xlu0.b32.cont [3/16] %v119, 128
    %207 = vxpose.xlu0.b32.cont [4/16] %v120, 128
    %208 = vxpose.xlu0.b32.cont [5/16] 0.0, 128
    %209 = vxpose.xlu0.b32.cont [6/16] 0.0, 128
    %210 = vxpose.xlu0.b32.cont [7/16] 0.0, 128
    %211 = vxpose.xlu0.b32.cont [8/16] 0.0, 128
    %212 = vxpose.xlu0.b32.cont [9/16] 0.0, 128
    %213 = vxpose.xlu0.b32.cont [10/16] 0.0, 128
    %214 = vxpose.xlu0.b32.cont [11/16] 0.0, 128
    %215 = vxpose.xlu0.b32.cont [12/16] 0.0, 128
    %216 = vxpose.xlu0.b32.cont [13/16] 0.0, 128
    %217 = vxpose.xlu0.b32.cont [14/16] 0.0, 128
    %218 = vxpose.xlu0.b32.cont [15/16] 0.0, 128
    %219 = vxpose.xlu0.b32.end [16/16] 0.0, 128
    %v220 = vpop.trf.xlu0
    %v221 = vpop.trf.xlu0
    %v222 = vpop.trf.xlu0
    %v223 = vpop.trf.xlu0
    %v224 = vpop.trf.xlu0
    %v225 = vpop.trf.xlu0
    %v226 = vpop.trf.xlu0
    %v227 = vpop.trf.xlu0
    %v228 = vpop.trf.xlu0
    %v229 = vpop.trf.xlu0
    %v230 = vpop.trf.xlu0
    %v231 = vpop.trf.xlu0
    %v232 = vpop.trf.xlu0
    %v233 = vpop.trf.xlu0
    %v234 = vpop.trf.xlu0
    %v235 = vpop.trf.xlu0
    %v237 = vsel %vm122, %v220, 0
    %239 = vmatprep.subr.mxu0 0.0
    %240 = vmatpush1.xpose.msra.mxu0 %v124
    %241 = vmatprep.subr.mxu0 0.0
    %242 = vmatpush1.xpose.msra.mxu0 %v127
    %243 = vmatprep.subr.mxu0 0.0
    %244 = vmatpush1.xpose.msra.mxu0 0.0
    %245 = vmatprep.subr.mxu0 0.0
    %246 = vmatpush1.xpose.msra.mxu0 0.0
    %247 = vmatprep.subr.mxu0 0.0
    %248 = vmatpush1.xpose.msra.mxu0 0.0
    %249 = vmatprep.subr.mxu0 0.0
    %250 = vmatpush1.xpose.msra.mxu0 0.0
    %251 = vmatprep.subr.mxu0 0.0
    %252 = vmatpush1.xpose.msra.mxu0 0.0
    %253 = vmatprep.subr.mxu0 0.0
    %254 = vmatpush1.xpose.msra.mxu0 0.0
    %255 = vmatprep.subr.mxu0 0.0
    %256 = vmatpush1.xpose.msra.mxu0 0.0
    %257 = vmatprep.subr.mxu0 0.0
    %258 = vmatpush1.xpose.msra.mxu0 0.0
    %259 = vmatprep.subr.mxu0 0.0
    %260 = vmatpush1.xpose.msra.mxu0 0.0
    %261 = vmatprep.subr.mxu0 0.0
    %262 = vmatpush1.xpose.msra.mxu0 0.0
    %263 = vmatprep.subr.mxu0 0.0
    %264 = vmatpush1.xpose.msra.mxu0 0.0
    %265 = vmatprep.subr.mxu0 0.0
    %266 = vmatpush1.xpose.msra.mxu0 0.0
    %267 = vmatprep.subr.mxu0 0.0
    %268 = vmatpush1.xpose.msra.mxu0 0.0
    %269 = vmatprep.subr.mxu0 0.0
    %270 = vmatpush1.xpose.msra.mxu0 0.0
    %271 = vmatprep.subr.mxu0 0.0
    %272 = vmatpush1.xpose.msra.mxu0 0.0
    %273 = vmatprep.subr.mxu0 0.0
    %274 = vmatpush1.xpose.msra.mxu0 0.0
    %275 = vmatprep.subr.mxu0 0.0
    %276 = vmatpush1.xpose.msra.mxu0 0.0
    %277 = vmatprep.subr.mxu0 0.0
    %278 = vmatpush1.xpose.msra.mxu0 0.0
    %279 = vmatprep.subr.mxu0 0.0
    %280 = vmatpush1.xpose.msra.mxu0 0.0
    %281 = vmatprep.subr.mxu0 0.0
    %282 = vmatpush1.xpose.msra.mxu0 0.0
    %283 = vmatprep.subr.mxu0 0.0
    %284 = vmatpush1.xpose.msra.mxu0 0.0
    %285 = vmatprep.subr.mxu0 0.0
    %286 = vmatpush1.xpose.msra.mxu0 0.0
    %287 = vmatprep.subr.mxu0 0.0
    %288 = vmatpush1.xpose.msra.mxu0 0.0
    %289 = vmatprep.subr.mxu0 0.0
    %290 = vmatpush1.xpose.msra.mxu0 0.0
    %291 = vmatprep.subr.mxu0 0.0
    %292 = vmatpush1.xpose.msra.mxu0 0.0
    %293 = vmatprep.subr.mxu0 0.0
    %294 = vmatpush1.xpose.msra.mxu0 0.0
    %295 = vmatprep.subr.mxu0 0.0
    %296 = vmatpush1.xpose.msra.mxu0 0.0
    %297 = vmatprep.subr.mxu0 0.0
    %298 = vmatpush1.xpose.msra.mxu0 0.0
    %299 = vmatprep.subr.mxu0 0.0
    %300 = vmatpush1.xpose.msra.mxu0 0.0
    %301 = vmatprep.subr.mxu0 0.0
    %302 = vmatpush1.xpose.msra.mxu0 0.0
    %303 = vmatprep.mubr.f32.mxu0 0.0
    %304 = vmatmul.mubr.f32.gmra.mrb[0].mxu0 %v237
    %v305 = vpop.f32.mrb[0].mxu0
    %v306 = vadd.f32 0.0, %v305
    %v307 = vpop.f32.mrb[0].mxu0
    %308 = vdwg.mxu0
    %v309 = vld [vmem:[%s1] sm:$0xff]
    %v310 = vld [vmem:[%s1 + $0x8] sm:$0xff]
    %v311 = vld [vmem:[%s1 + $0x10] sm:$0xff]
    %v312 = vld [vmem:[%s1 + $0x18] sm:$0xff]
    %v313 = vld [vmem:[%s1 + $0x20] sm:$0xff]
    %v314 = vld [vmem:[%s1 + $0x28] sm:$0xff]
    %v315 = vld [vmem:[%s1 + $0x30] sm:$0xff]
    %v316 = vld [vmem:[%s1 + $0x38] sm:$0xff]
    %v317 = vlaneseq
    %v318 = vshrl.u32 %v317, 7
    %v319 = vsub.s32 0, %v318
    %v320 = vrot.slane %v306, %v319
    %322 = vbcast.lane.b32.xlu0 %v320, 256
    %v323 = vpop.permute.xlu0 %322
    %s325 = sor.u32 256, 8
    %326 = vbcast.lane.b32.xlu0 %v320, %s325
    %v327 = vpop.permute.xlu0 %326
    %v328 = vlaneseq
    %v329 = vshrl.u32 %v328, 7
    %v330 = vsub.s32 1, %v329
    %v331 = vrot.slane %v306, %v330
    %333 = vbcast.lane.b32.xlu0 %v331, 256
    %v334 = vpop.permute.xlu0 %333
    %s336 = sor.u32 256, 8
    %337 = vbcast.lane.b32.xlu0 %v331, %s336
    %v338 = vpop.permute.xlu0 %337
    %v339 = vlaneseq
    %v340 = vshrl.u32 %v339, 7
    %v341 = vsub.s32 2, %v340
    %v342 = vrot.slane %v306, %v341
    %344 = vbcast.lane.b32.xlu0 %v342, 256
    %v345 = vpop.permute.xlu0 %344
    %s347 = sor.u32 256, 8
    %348 = vbcast.lane.b32.xlu0 %v342, %s347
    %v349 = vpop.permute.xlu0 %348
    %v350 = vlaneseq
    %v351 = vshrl.u32 %v350, 7
    %v352 = vsub.s32 3, %v351
    %v353 = vrot.slane %v306, %v352
    %355 = vbcast.lane.b32.xlu0 %v353, 256
    %v356 = vpop.permute.xlu0 %355
    %s358 = sor.u32 256, 8
    %359 = vbcast.lane.b32.xlu0 %v353, %s358
    %v360 = vpop.permute.xlu0 %359
    %v361 = vadd.f32 %v309, %v323
    %v362 = vadd.f32 %v310, %v327
    %v363 = vadd.f32 %v311, %v334
    %v364 = vadd.f32 %v312, %v338
    %v365 = vadd.f32 %v313, %v345
    %v366 = vadd.f32 %v314, %v349
    %v367 = vadd.f32 %v315, %v356
    %v368 = vadd.f32 %v316, %v360
    %v370 = vcombine.high %v306, %v306
    %v372 = vunpack.c.l.s4 1966171168
    %v373 = vunpack.c.0.s8 %v372
    %v374 = vlaneseq
    %v375 = vshrl.u32 %v374, 7
    %v376 = vsub.s32 %v373, %v375
    %v377 = vrot.slane %v370, %v376
    %v378 = vcombine.high %v377, %v377
    %v380 = vunpack.c.l.s4 1966171168
    %v381 = vunpack.c.0.s8 %v380
    %v382 = vlaneseq
    %v383 = vshrl.u32 %v382, 7
    %v384 = vsub.s32 %v381, %v383
    %v385 = vrot.slane %v377, %v384
    %v387 = vunpack.c.l.s4 1966171168
    %v388 = vunpack.c.0.s8 %v387
    %v389 = vlaneseq
    %v390 = vshrl.u32 %v389, 7
    %v391 = vsub.s32 %v388, %v390
    %v392 = vrot.slane %v378, %v391
    %v393 = vcombine.high %v385, %v385
    %v394 = vcombine.high %v392, %v392
    %v395 = vlaneseq
    %v396 = vshrl.u32 %v395, 7
    %v397 = vsub.s32 0, %v396
    %v398 = vrot.slane %v385, %v397
    %v399 = vlaneseq
    %v400 = vshrl.u32 %v399, 7
    %v401 = vsub.s32 0, %v400
    %v402 = vrot.slane %v392, %v401
    %v403 = vlaneseq
    %v404 = vshrl.u32 %v403, 7
    %v405 = vsub.s32 0, %v404
    %v406 = vrot.slane %v393, %v405
    %v407 = vlaneseq
    %v408 = vshrl.u32 %v407, 7
    %v409 = vsub.s32 0, %v408
    %v410 = vrot.slane %v394, %v409
    %v415 = vadd.f32 %v361, %v398
    %v416 = vadd.f32 %v362, %v398
    %v417 = vadd.f32 %v363, %v402
    %v418 = vadd.f32 %v364, %v402
    %v419 = vadd.f32 %v365, %v406
    %v420 = vadd.f32 %v366, %v406
    %v421 = vadd.f32 %v367, %v410
    %v422 = vadd.f32 %v368, %v410
    %vm423 = vcmp.gt.f32.partialorder %v415, 0.0
    %vm424 = vcmp.gt.f32.partialorder %v416, 0.0
    %vm425 = vcmp.gt.f32.partialorder %v417, 0.0
    %vm426 = vcmp.gt.f32.partialorder %v418, 0.0
    %vm427 = vcmp.gt.f32.partialorder %v419, 0.0
    %vm428 = vcmp.gt.f32.partialorder %v420, 0.0
    %vm429 = vcmp.gt.f32.partialorder %v421, 0.0
    %vm430 = vcmp.gt.f32.partialorder %v422, 0.0
    %v431 = vmul.f32 %v415, 0.2
    %v432 = vmul.f32 %v416, 0.2
    %v433 = vmul.f32 %v417, 0.2
    %v434 = vmul.f32 %v418, 0.2
    %v435 = vmul.f32 %v419, 0.2
    %v436 = vmul.f32 %v420, 0.2
    %v437 = vmul.f32 %v421, 0.2
    %v438 = vmul.f32 %v422, 0.2
    %v439 = vsel %vm423, %v415, %v431
    %v440 = vsel %vm424, %v416, %v432
    %v441 = vsel %vm425, %v417, %v433
    %v442 = vsel %vm426, %v418, %v434
    %v443 = vsel %vm427, %v419, %v435
    %v444 = vsel %vm428, %v420, %v436
    %v445 = vsel %vm429, %v421, %v437
    %v446 = vsel %vm430, %v422, %v438
    %vm447 = vcmask 130048
    %v448 = vsel %vm447, %v439, -inf
    %449 = vmax.xlane.f32.xlu0 %v448
    %v450 = vpop.xlane.xlu0 %449
    %v451 = vsel %vm447, %v440, -inf
    %452 = vmax.xlane.f32.xlu0 %v451
    %v453 = vpop.xlane.xlu0 %452
    %v454 = vsel %vm447, %v441, -inf
    %455 = vmax.xlane.f32.xlu0 %v454
    %v456 = vpop.xlane.xlu0 %455
    %v457 = vsel %vm447, %v442, -inf
    %458 = vmax.xlane.f32.xlu0 %v457
    %v459 = vpop.xlane.xlu0 %458
    %v460 = vsel %vm447, %v443, -inf
    %461 = vmax.xlane.f32.xlu0 %v460
    %v462 = vpop.xlane.xlu0 %461
    %v463 = vsel %vm447, %v444, -inf
    %464 = vmax.xlane.f32.xlu0 %v463
    %v465 = vpop.xlane.xlu0 %464
    %v466 = vsel %vm447, %v445, -inf
    %467 = vmax.xlane.f32.xlu0 %v466
    %v468 = vpop.xlane.xlu0 %467
    %v469 = vsel %vm447, %v446, -inf
    %470 = vmax.xlane.f32.xlu0 %v469
    %v471 = vpop.xlane.xlu0 %470
    %v472 = vsub.f32 %v439, %v450
    %v473 = vsub.f32 %v440, %v453
    %v474 = vsub.f32 %v441, %v456
    %v475 = vsub.f32 %v442, %v459
    %v476 = vsub.f32 %v443, %v462
    %v477 = vsub.f32 %v444, %v465
    %v478 = vsub.f32 %v445, %v468
    %v479 = vsub.f32 %v446, %v471
    %v480 = vmul.f32 %v472, 1.442695
    %v481 = vpow.pop %v480
    %v482 = vmul.f32 %v473, 1.442695
    %v483 = vpow.pop %v482
    %v484 = vmul.f32 %v474, 1.442695
    %v485 = vpow.pop %v484
    %v486 = vmul.f32 %v475, 1.442695
    %v487 = vpow.pop %v486
    %v488 = vmul.f32 %v476, 1.442695
    %v489 = vpow.pop %v488
    %v490 = vmul.f32 %v477, 1.442695
    %v491 = vpow.pop %v490
    %v492 = vmul.f32 %v478, 1.442695
    %v493 = vpow.pop %v492
    %v494 = vmul.f32 %v479, 1.442695
    %v495 = vpow.pop %v494
    %v496 = vsel %vm447, %v481, 0.0
    %497 = vadd.xlane.f32.xlu0 %v496
    %v498 = vpop.xlane.xlu0 %497
    %v499 = vsel %vm447, %v483, 0.0
    %500 = vadd.xlane.f32.xlu0 %v499
    %v501 = vpop.xlane.xlu0 %500
    %v502 = vsel %vm447, %v485, 0.0
    %503 = vadd.xlane.f32.xlu0 %v502
    %v504 = vpop.xlane.xlu0 %503
    %v505 = vsel %vm447, %v487, 0.0
    %506 = vadd.xlane.f32.xlu0 %v505
    %v507 = vpop.xlane.xlu0 %506
    %v508 = vsel %vm447, %v489, 0.0
    %509 = vadd.xlane.f32.xlu0 %v508
    %v510 = vpop.xlane.xlu0 %509
    %v511 = vsel %vm447, %v491, 0.0
    %512 = vadd.xlane.f32.xlu0 %v511
    %v513 = vpop.xlane.xlu0 %512
    %v514 = vsel %vm447, %v493, 0.0
    %515 = vadd.xlane.f32.xlu0 %v514
    %v516 = vpop.xlane.xlu0 %515
    %v517 = vsel %vm447, %v495, 0.0
    %518 = vadd.xlane.f32.xlu0 %v517
    %v519 = vpop.xlane.xlu0 %518
    %v520 = vrcp.pop %v498
    %v521 = vmul.f32 1.0, %v520
    %v522 = vrcp.pop %v501
    %v523 = vmul.f32 1.0, %v522
    %v524 = vrcp.pop %v504
    %v525 = vmul.f32 1.0, %v524
    %v526 = vrcp.pop %v507
    %v527 = vmul.f32 1.0, %v526
    %v528 = vrcp.pop %v510
    %v529 = vmul.f32 1.0, %v528
    %v530 = vrcp.pop %v513
    %v531 = vmul.f32 1.0, %v530
    %v532 = vrcp.pop %v516
    %v533 = vmul.f32 1.0, %v532
    %v534 = vrcp.pop %v519
    %v535 = vmul.f32 1.0, %v534
    %v536 = vmul.f32 %v481, %v521
    %v537 = vmul.f32 %v483, %v523
    %v538 = vmul.f32 %v485, %v525
    %v539 = vmul.f32 %v487, %v527
    %v540 = vmul.f32 %v489, %v529
    %v541 = vmul.f32 %v491, %v531
    %v542 = vmul.f32 %v493, %v533
    %v543 = vmul.f32 %v495, %v535
    %v545 = vsel %vm447, %v536, 0
    %v548 = vsel %vm447, %v537, 0
    %v551 = vsel %vm447, %v538, 0
    %v554 = vsel %vm447, %v539, 0
    %v557 = vsel %vm447, %v540, 0
    %v560 = vsel %vm447, %v541, 0
    %v563 = vsel %vm447, %v542, 0
    %v566 = vsel %vm447, %v543, 0
    %568 = vmatprep.subr.mxu0 0.0
    %569 = vmatpush1.msra.mxu0 %v196
    %570 = vmatprep.subr.mxu0 0.0
    %571 = vmatpush1.msra.mxu0 %v201
    %572 = vmatprep.subr.mxu0 0.0
    %573 = vmatpush1.msra.mxu0 0.0
    %574 = vmatprep.subr.mxu0 0.0
    %575 = vmatpush1.msra.mxu0 0.0
    %576 = vmatprep.subr.mxu0 0.0
    %577 = vmatpush1.msra.mxu0 0.0
    %578 = vmatprep.subr.mxu0 0.0
    %579 = vmatpush1.msra.mxu0 0.0
    %580 = vmatprep.subr.mxu0 0.0
    %581 = vmatpush1.msra.mxu0 0.0
    %582 = vmatprep.subr.mxu0 0.0
    %583 = vmatpush1.msra.mxu0 0.0
    %584 = vmatprep.subr.mxu0 0.0
    %585 = vmatpush1.msra.mxu0 0.0
    %586 = vmatprep.subr.mxu0 0.0
    %587 = vmatpush1.msra.mxu0 0.0
    %588 = vmatprep.subr.mxu0 0.0
    %589 = vmatpush1.msra.mxu0 0.0
    %590 = vmatprep.subr.mxu0 0.0
    %591 = vmatpush1.msra.mxu0 0.0
    %592 = vmatprep.subr.mxu0 0.0
    %593 = vmatpush1.msra.mxu0 0.0
    %594 = vmatprep.subr.mxu0 0.0
    %595 = vmatpush1.msra.mxu0 0.0
    %596 = vmatprep.subr.mxu0 0.0
    %597 = vmatpush1.msra.mxu0 0.0
    %598 = vmatprep.subr.mxu0 0.0
    %599 = vmatpush1.msra.mxu0 0.0
    %600 = vmatprep.subr.mxu0 0.0
    %601 = vmatpush1.msra.mxu0 0.0
    %602 = vmatprep.subr.mxu0 0.0
    %603 = vmatpush1.msra.mxu0 0.0
    %604 = vmatprep.subr.mxu0 0.0
    %605 = vmatpush1.msra.mxu0 0.0
    %606 = vmatprep.subr.mxu0 0.0
    %607 = vmatpush1.msra.mxu0 0.0
    %608 = vmatprep.subr.mxu0 0.0
    %609 = vmatpush1.msra.mxu0 0.0
    %610 = vmatprep.subr.mxu0 0.0
    %611 = vmatpush1.msra.mxu0 0.0
    %612 = vmatprep.subr.mxu0 0.0
    %613 = vmatpush1.msra.mxu0 0.0
    %614 = vmatprep.subr.mxu0 0.0
    %615 = vmatpush1.msra.mxu0 0.0
    %616 = vmatprep.subr.mxu0 0.0
    %617 = vmatpush1.msra.mxu0 0.0
    %618 = vmatprep.subr.mxu0 0.0
    %619 = vmatpush1.msra.mxu0 0.0
    %620 = vmatprep.subr.mxu0 0.0
    %621 = vmatpush1.msra.mxu0 0.0
    %622 = vmatprep.subr.mxu0 0.0
    %623 = vmatpush1.msra.mxu0 0.0
    %624 = vmatprep.subr.mxu0 0.0
    %625 = vmatpush1.msra.mxu0 0.0
    %626 = vmatprep.subr.mxu0 0.0
    %627 = vmatpush1.msra.mxu0 0.0
    %628 = vmatprep.subr.mxu0 0.0
    %629 = vmatpush1.msra.mxu0 0.0
    %630 = vmatprep.subr.mxu0 0.0
    %631 = vmatpush1.msra.mxu0 0.0
    %632 = vmatprep.mubr.f32.mxu0 0.0
    %633 = vmatmul.mubr.f32.gmra.mrb[0].mxu0 %v545
    %v634 = vpop.f32.mrb[0].mxu0
    %v635 = vadd.f32 0.0, %v634
    %v636 = vpop.f32.mrb[0].mxu0
    %637 = vmatprep.mubr.f32.mxu0 0.0
    %638 = vmatmul.mubr.f32.gmra.mrb[0].mxu0 %v548
    %v639 = vpop.f32.mrb[0].mxu0
    %v640 = vadd.f32 0.0, %v639
    %v641 = vpop.f32.mrb[0].mxu0
    %642 = vmatprep.mubr.f32.mxu0 0.0
    %643 = vmatmul.mubr.f32.gmra.mrb[0].mxu0 %v551
    %v644 = vpop.f32.mrb[0].mxu0
    %v645 = vadd.f32 0.0, %v644
    %v646 = vpop.f32.mrb[0].mxu0
    %647 = vmatprep.mubr.f32.mxu0 0.0
    %648 = vmatmul.mubr.f32.gmra.mrb[0].mxu0 %v554
    %v649 = vpop.f32.mrb[0].mxu0
    %v650 = vadd.f32 0.0, %v649
    %v651 = vpop.f32.mrb[0].mxu0
    %652 = vmatprep.mubr.f32.mxu0 0.0
    %653 = vmatmul.mubr.f32.gmra.mrb[0].mxu0 %v557
    %v654 = vpop.f32.mrb[0].mxu0
    %v655 = vadd.f32 0.0, %v654
    %v656 = vpop.f32.mrb[0].mxu0
    %657 = vmatprep.mubr.f32.mxu0 0.0
    %658 = vmatmul.mubr.f32.gmra.mrb[0].mxu0 %v560
    %v659 = vpop.f32.mrb[0].mxu0
    %v660 = vadd.f32 0.0, %v659
    %v661 = vpop.f32.mrb[0].mxu0
    %662 = vmatprep.mubr.f32.mxu0 0.0
    %663 = vmatmul.mubr.f32.gmra.mrb[0].mxu0 %v563
    %v664 = vpop.f32.mrb[0].mxu0
    %v665 = vadd.f32 0.0, %v664
    %v666 = vpop.f32.mrb[0].mxu0
    %667 = vmatprep.mubr.f32.mxu0 0.0
    %668 = vmatmul.mubr.f32.gmra.mrb[0].mxu0 %v566
    %v669 = vpop.f32.mrb[0].mxu0
    %v670 = vadd.f32 0.0, %v669
    %v671 = vpop.f32.mrb[0].mxu0
    %672 = vdwg.mxu0
    %v673 = vmul.f32 %v635, %v17
    %v674 = vmul.f32 %v640, %v18
    %v675 = vmul.f32 %v645, %v19
    %v676 = vmul.f32 %v650, %v20
    %v677 = vmul.f32 %v655, %v21
    %v678 = vmul.f32 %v660, %v22
    %v679 = vmul.f32 %v665, %v23
    %v680 = vmul.f32 %v670, %v24
    %v681 = vadd.f32 %v673, %v675
    %v682 = vadd.f32 %v674, %v676
    %v683 = vadd.f32 %v681, %v677
    %v684 = vadd.f32 %v682, %v678
    %v685 = vadd.f32 %v683, %v679
    %v686 = vadd.f32 %v684, %v680
    %v687 = vadd.f32 %v105, %v685
    %v688 = vadd.f32 %v110, %v686
    %v689 = vlaneseq
    %v690 = vshrl.u32 %v689, 7
    %v691 = vsub.s32 0, %v690
    %v692 = vrot.slane %v121, %v691
    %v693 = vadd.f32 %v687, %v692
    %v694 = vadd.f32 %v688, %v692
    %v695 = vmax.f32 %v693, 0.0
    %v696 = vmax.f32 %v694, 0.0
    %v697 = vld [vmem:[%s2 + $0x30] sm:$0xff]
    %v698 = vld [vmem:[%s2 + $0x38] sm:$0xff]
    %v699 = vld [vmem:[%s2 + $0x40] sm:$0xff]
    %v700 = vld [vmem:[%s2 + $0x48] sm:$0xff]
    %v701 = vld [vmem:[%s2 + $0x90] sm:$0xff]
    %v702 = vld [vmem:[%s2 + $0x98] sm:$0xff]
    %v703 = vld [vmem:[%s2 + $0xa0] sm:$0xff]
    %v704 = vld [vmem:[%s2 + $0xa8] sm:$0xff]
    %v705 = vld [vmem:[%s2 + $0xd8] sm:$0x1]
    %v707 = vsel %vm122, %v695, 0
    %v710 = vsel %vm122, %v696, 0
    %712 = vmatprep.subr.mxu0 0.0
    %713 = vmatpush1.msra.mxu0 %v697
    %714 = vmatprep.subr.mxu0 0.0
    %715 = vmatpush1.msra.mxu0 %v698
    %716 = vmatprep.subr.mxu0 0.0
    %717 = vmatpush1.msra.mxu0 %v699
    %718 = vmatprep.subr.mxu0 0.0
    %719 = vmatpush1.msra.mxu0 %v700
    %720 = vmatprep.subr.mxu0 0.0
    %721 = vmatpush1.msra.mxu0 0.0
    %722 = vmatprep.subr.mxu0 0.0
    %723 = vmatpush1.msra.mxu0 0.0
    %724 = vmatprep.subr.mxu0 0.0
    %725 = vmatpush1.msra.mxu0 0.0
    %726 = vmatprep.subr.mxu0 0.0
    %727 = vmatpush1.msra.mxu0 0.0
    %728 = vmatprep.subr.mxu0 0.0
    %729 = vmatpush1.msra.mxu0 0.0
    %730 = vmatprep.subr.mxu0 0.0
    %731 = vmatpush1.msra.mxu0 0.0
    %732 = vmatprep.subr.mxu0 0.0
    %733 = vmatpush1.msra.mxu0 0.0
    %734 = vmatprep.subr.mxu0 0.0
    %735 = vmatpush1.msra.mxu0 0.0
    %736 = vmatprep.subr.mxu0 0.0
    %737 = vmatpush1.msra.mxu0 0.0
    %738 = vmatprep.subr.mxu0 0.0
    %739 = vmatpush1.msra.mxu0 0.0
    %740 = vmatprep.subr.mxu0 0.0
    %741 = vmatpush1.msra.mxu0 0.0
    %742 = vmatprep.subr.mxu0 0.0
    %743 = vmatpush1.msra.mxu0 0.0
    %744 = vmatprep.subr.mxu0 0.0
    %745 = vmatpush1.msra.mxu0 0.0
    %746 = vmatprep.subr.mxu0 0.0
    %747 = vmatpush1.msra.mxu0 0.0
    %748 = vmatprep.subr.mxu0 0.0
    %749 = vmatpush1.msra.mxu0 0.0
    %750 = vmatprep.subr.mxu0 0.0
    %751 = vmatpush1.msra.mxu0 0.0
    %752 = vmatprep.subr.mxu0 0.0
    %753 = vmatpush1.msra.mxu0 0.0
    %754 = vmatprep.subr.mxu0 0.0
    %755 = vmatpush1.msra.mxu0 0.0
    %756 = vmatprep.subr.mxu0 0.0
    %757 = vmatpush1.msra.mxu0 0.0
    %758 = vmatprep.subr.mxu0 0.0
    %759 = vmatpush1.msra.mxu0 0.0
    %760 = vmatprep.subr.mxu0 0.0
    %761 = vmatpush1.msra.mxu0 0.0
    %762 = vmatprep.subr.mxu0 0.0
    %763 = vmatpush1.msra.mxu0 0.0
    %764 = vmatprep.subr.mxu0 0.0
    %765 = vmatpush1.msra.mxu0 0.0
    %766 = vmatprep.subr.mxu0 0.0
    %767 = vmatpush1.msra.mxu0 0.0
    %768 = vmatprep.subr.mxu0 0.0
    %769 = vmatpush1.msra.mxu0 0.0
    %770 = vmatprep.subr.mxu0 0.0
    %771 = vmatpush1.msra.mxu0 0.0
    %772 = vmatprep.subr.mxu0 0.0
    %773 = vmatpush1.msra.mxu0 0.0
    %774 = vmatprep.subr.mxu0 0.0
    %775 = vmatpush1.msra.mxu0 0.0
    %776 = vmatprep.mubr.f32.mxu0 0.0
    %777 = vmatmul.mubr.f32.gmra.mrb[0].mxu0 %v707
    %v778 = vpop.f32.mrb[0].mxu0
    %v779 = vadd.f32 0.0, %v778
    %v780 = vpop.f32.mrb[0].mxu0
    %781 = vmatprep.mubr.f32.mxu0 0.0
    %782 = vmatmul.mubr.f32.gmra.mrb[0].mxu0 %v710
    %v783 = vpop.f32.mrb[0].mxu0
    %v784 = vadd.f32 0.0, %v783
    %v785 = vpop.f32.mrb[0].mxu0
    %786 = vdwg.mxu0
    %787 = vxpose.xlu0.b32.start [1/16] %v701, 128
    %788 = vxpose.xlu0.b32.cont [2/16] %v702, 128
    %789 = vxpose.xlu0.b32.cont [3/16] %v703, 128
    %790 = vxpose.xlu0.b32.cont [4/16] %v704, 128
    %791 = vxpose.xlu0.b32.cont [5/16] 0.0, 128
    %792 = vxpose.xlu0.b32.cont [6/16] 0.0, 128
    %793 = vxpose.xlu0.b32.cont [7/16] 0.0, 128
    %794 = vxpose.xlu0.b32.cont [8/16] 0.0, 128
    %795 = vxpose.xlu0.b32.cont [9/16] 0.0, 128
    %796 = vxpose.xlu0.b32.cont [10/16] 0.0, 128
    %797 = vxpose.xlu0.b32.cont [11/16] 0.0, 128
    %798 = vxpose.xlu0.b32.cont [12/16] 0.0, 128
    %799 = vxpose.xlu0.b32.cont [13/16] 0.0, 128
    %800 = vxpose.xlu0.b32.cont [14/16] 0.0, 128
    %801 = vxpose.xlu0.b32.cont [15/16] 0.0, 128
    %802 = vxpose.xlu0.b32.end [16/16] 0.0, 128
    %v803 = vpop.trf.xlu0
    %v804 = vpop.trf.xlu0
    %v805 = vpop.trf.xlu0
    %v806 = vpop.trf.xlu0
    %v807 = vpop.trf.xlu0
    %v808 = vpop.trf.xlu0
    %v809 = vpop.trf.xlu0
    %v810 = vpop.trf.xlu0
    %v811 = vpop.trf.xlu0
    %v812 = vpop.trf.xlu0
    %v813 = vpop.trf.xlu0
    %v814 = vpop.trf.xlu0
    %v815 = vpop.trf.xlu0
    %v816 = vpop.trf.xlu0
    %v817 = vpop.trf.xlu0
    %v818 = vpop.trf.xlu0
    %v820 = vsel %vm122, %v803, 0
    %822 = vmatprep.subr.mxu0 0.0
    %823 = vmatpush1.xpose.msra.mxu0 %v707
    %824 = vmatprep.subr.mxu0 0.0
    %825 = vmatpush1.xpose.msra.mxu0 %v710
    %826 = vmatprep.subr.mxu0 0.0
    %827 = vmatpush1.xpose.msra.mxu0 0.0
    %828 = vmatprep.subr.mxu0 0.0
    %829 = vmatpush1.xpose.msra.mxu0 0.0
    %830 = vmatprep.subr.mxu0 0.0
    %831 = vmatpush1.xpose.msra.mxu0 0.0
    %832 = vmatprep.subr.mxu0 0.0
    %833 = vmatpush1.xpose.msra.mxu0 0.0
    %834 = vmatprep.subr.mxu0 0.0
    %835 = vmatpush1.xpose.msra.mxu0 0.0
    %836 = vmatprep.subr.mxu0 0.0
    %837 = vmatpush1.xpose.msra.mxu0 0.0
    %838 = vmatprep.subr.mxu0 0.0
    %839 = vmatpush1.xpose.msra.mxu0 0.0
    %840 = vmatprep.subr.mxu0 0.0
    %841 = vmatpush1.xpose.msra.mxu0 0.0
    %842 = vmatprep.subr.mxu0 0.0
    %843 = vmatpush1.xpose.msra.mxu0 0.0
    %844 = vmatprep.subr.mxu0 0.0
    %845 = vmatpush1.xpose.msra.mxu0 0.0
    %846 = vmatprep.subr.mxu0 0.0
    %847 = vmatpush1.xpose.msra.mxu0 0.0
    %848 = vmatprep.subr.mxu0 0.0
    %849 = vmatpush1.xpose.msra.mxu0 0.0
    %850 = vmatprep.subr.mxu0 0.0
    %851 = vmatpush1.xpose.msra.mxu0 0.0
    %852 = vmatprep.subr.mxu0 0.0
    %853 = vmatpush1.xpose.msra.mxu0 0.0
    %854 = vmatprep.subr.mxu0 0.0
    %855 = vmatpush1.xpose.msra.mxu0 0.0
    %856 = vmatprep.subr.mxu0 0.0
    %857 = vmatpush1.xpose.msra.mxu0 0.0
    %858 = vmatprep.subr.mxu0 0.0
    %859 = vmatpush1.xpose.msra.mxu0 0.0
    %860 = vmatprep.subr.mxu0 0.0
    %861 = vmatpush1.xpose.msra.mxu0 0.0
    %862 = vmatprep.subr.mxu0 0.0
    %863 = vmatpush1.xpose.msra.mxu0 0.0
    %864 = vmatprep.subr.mxu0 0.0
    %865 = vmatpush1.xpose.msra.mxu0 0.0
    %866 = vmatprep.subr.mxu0 0.0
    %867 = vmatpush1.xpose.msra.mxu0 0.0
    %868 = vmatprep.subr.mxu0 0.0
    %869 = vmatpush1.xpose.msra.mxu0 0.0
    %870 = vmatprep.subr.mxu0 0.0
    %871 = vmatpush1.xpose.msra.mxu0 0.0
    %872 = vmatprep.subr.mxu0 0.0
    %873 = vmatpush1.xpose.msra.mxu0 0.0
    %874 = vmatprep.subr.mxu0 0.0
    %875 = vmatpush1.xpose.msra.mxu0 0.0
    %876 = vmatprep.subr.mxu0 0.0
    %877 = vmatpush1.xpose.msra.mxu0 0.0
    %878 = vmatprep.subr.mxu0 0.0
    %879 = vmatpush1.xpose.msra.mxu0 0.0
    %880 = vmatprep.subr.mxu0 0.0
    %881 = vmatpush1.xpose.msra.mxu0 0.0
    %882 = vmatprep.subr.mxu0 0.0
    %883 = vmatpush1.xpose.msra.mxu0 0.0
    %884 = vmatprep.subr.mxu0 0.0
    %885 = vmatpush1.xpose.msra.mxu0 0.0
    %886 = vmatprep.mubr.f32.mxu0 0.0
    %887 = vmatmul.mubr.f32.gmra.mrb[0].mxu0 %v820
    %v888 = vpop.f32.mrb[0].mxu0
    %v889 = vadd.f32 0.0, %v888
    %v890 = vpop.f32.mrb[0].mxu0
    %891 = vdwg.mxu0
    %s892 = scalar_lea.vmem %s1, 64
    %v893 = vld [vmem:[%s892] sm:$0xff]
    %v894 = vld [vmem:[%s892 + $0x8] sm:$0xff]
    %v895 = vld [vmem:[%s892 + $0x10] sm:$0xff]
    %v896 = vld [vmem:[%s892 + $0x18] sm:$0xff]
    %v897 = vld [vmem:[%s892 + $0x20] sm:$0xff]
    %v898 = vld [vmem:[%s892 + $0x28] sm:$0xff]
    %v899 = vld [vmem:[%s892 + $0x30] sm:$0xff]
    %v900 = vld [vmem:[%s892 + $0x38] sm:$0xff]
    %v901 = vlaneseq
    %v902 = vshrl.u32 %v901, 7
    %v903 = vsub.s32 0, %v902
    %v904 = vrot.slane %v889, %v903
    %906 = vbcast.lane.b32.xlu0 %v904, 256
    %v907 = vpop.permute.xlu0 %906
    %s909 = sor.u32 256, 8
    %910 = vbcast.lane.b32.xlu0 %v904, %s909
    %v911 = vpop.permute.xlu0 %910
    %v912 = vlaneseq
    %v913 = vshrl.u32 %v912, 7
    %v914 = vsub.s32 1, %v913
    %v915 = vrot.slane %v889, %v914
    %917 = vbcast.lane.b32.xlu0 %v915, 256
    %v918 = vpop.permute.xlu0 %917
    %s920 = sor.u32 256, 8
    %921 = vbcast.lane.b32.xlu0 %v915, %s920
    %v922 = vpop.permute.xlu0 %921
    %v923 = vlaneseq
    %v924 = vshrl.u32 %v923, 7
    %v925 = vsub.s32 2, %v924
    %v926 = vrot.slane %v889, %v925
    %928 = vbcast.lane.b32.xlu0 %v926, 256
    %v929 = vpop.permute.xlu0 %928
    %s931 = sor.u32 256, 8
    %932 = vbcast.lane.b32.xlu0 %v926, %s931
    %v933 = vpop.permute.xlu0 %932
    %v934 = vlaneseq
    %v935 = vshrl.u32 %v934, 7
    %v936 = vsub.s32 3, %v935
    %v937 = vrot.slane %v889, %v936
    %939 = vbcast.lane.b32.xlu0 %v937, 256
    %v940 = vpop.permute.xlu0 %939
    %s942 = sor.u32 256, 8
    %943 = vbcast.lane.b32.xlu0 %v937, %s942
    %v944 = vpop.permute.xlu0 %943
    %v945 = vadd.f32 %v893, %v907
    %v946 = vadd.f32 %v894, %v911
    %v947 = vadd.f32 %v895, %v918
    %v948 = vadd.f32 %v896, %v922
    %v949 = vadd.f32 %v897, %v929
    %v950 = vadd.f32 %v898, %v933
    %v951 = vadd.f32 %v899, %v940
    %v952 = vadd.f32 %v900, %v944
    %v954 = vcombine.high %v889, %v889
    %v956 = vunpack.c.l.s4 1966171168
    %v957 = vunpack.c.0.s8 %v956
    %v958 = vlaneseq
    %v959 = vshrl.u32 %v958, 7
    %v960 = vsub.s32 %v957, %v959
    %v961 = vrot.slane %v954, %v960
    %v962 = vcombine.high %v961, %v961
    %v964 = vunpack.c.l.s4 1966171168
    %v965 = vunpack.c.0.s8 %v964
    %v966 = vlaneseq
    %v967 = vshrl.u32 %v966, 7
    %v968 = vsub.s32 %v965, %v967
    %v969 = vrot.slane %v961, %v968
    %v971 = vunpack.c.l.s4 1966171168
    %v972 = vunpack.c.0.s8 %v971
    %v973 = vlaneseq
    %v974 = vshrl.u32 %v973, 7
    %v975 = vsub.s32 %v972, %v974
    %v976 = vrot.slane %v962, %v975
    %v977 = vcombine.high %v969, %v969
    %v978 = vcombine.high %v976, %v976
    %v979 = vlaneseq
    %v980 = vshrl.u32 %v979, 7
    %v981 = vsub.s32 0, %v980
    %v982 = vrot.slane %v969, %v981
    %v983 = vlaneseq
    %v984 = vshrl.u32 %v983, 7
    %v985 = vsub.s32 0, %v984
    %v986 = vrot.slane %v976, %v985
    %v987 = vlaneseq
    %v988 = vshrl.u32 %v987, 7
    %v989 = vsub.s32 0, %v988
    %v990 = vrot.slane %v977, %v989
    %v991 = vlaneseq
    %v992 = vshrl.u32 %v991, 7
    %v993 = vsub.s32 0, %v992
    %v994 = vrot.slane %v978, %v993
    %v999 = vadd.f32 %v945, %v982
    %v1000 = vadd.f32 %v946, %v982
    %v1001 = vadd.f32 %v947, %v986
    %v1002 = vadd.f32 %v948, %v986
    %v1003 = vadd.f32 %v949, %v990
    %v1004 = vadd.f32 %v950, %v990
    %v1005 = vadd.f32 %v951, %v994
    %v1006 = vadd.f32 %v952, %v994
    %vm1007 = vcmp.gt.f32.partialorder %v999, 0.0
    %vm1008 = vcmp.gt.f32.partialorder %v1000, 0.0
    %vm1009 = vcmp.gt.f32.partialorder %v1001, 0.0
    %vm1010 = vcmp.gt.f32.partialorder %v1002, 0.0
    %vm1011 = vcmp.gt.f32.partialorder %v1003, 0.0
    %vm1012 = vcmp.gt.f32.partialorder %v1004, 0.0
    %vm1013 = vcmp.gt.f32.partialorder %v1005, 0.0
    %vm1014 = vcmp.gt.f32.partialorder %v1006, 0.0
    %v1015 = vmul.f32 %v999, 0.2
    %v1016 = vmul.f32 %v1000, 0.2
    %v1017 = vmul.f32 %v1001, 0.2
    %v1018 = vmul.f32 %v1002, 0.2
    %v1019 = vmul.f32 %v1003, 0.2
    %v1020 = vmul.f32 %v1004, 0.2
    %v1021 = vmul.f32 %v1005, 0.2
    %v1022 = vmul.f32 %v1006, 0.2
    %v1023 = vsel %vm1007, %v999, %v1015
    %v1024 = vsel %vm1008, %v1000, %v1016
    %v1025 = vsel %vm1009, %v1001, %v1017
    %v1026 = vsel %vm1010, %v1002, %v1018
    %v1027 = vsel %vm1011, %v1003, %v1019
    %v1028 = vsel %vm1012, %v1004, %v1020
    %v1029 = vsel %vm1013, %v1005, %v1021
    %v1030 = vsel %vm1014, %v1006, %v1022
    %v1031 = vsel %vm447, %v1023, -inf
    %1032 = vmax.xlane.f32.xlu0 %v1031
    %v1033 = vpop.xlane.xlu0 %1032
    %v1034 = vsel %vm447, %v1024, -inf
    %1035 = vmax.xlane.f32.xlu0 %v1034
    %v1036 = vpop.xlane.xlu0 %1035
    %v1037 = vsel %vm447, %v1025, -inf
    %1038 = vmax.xlane.f32.xlu0 %v1037
    %v1039 = vpop.xlane.xlu0 %1038
    %v1040 = vsel %vm447, %v1026, -inf
    %1041 = vmax.xlane.f32.xlu0 %v1040
    %v1042 = vpop.xlane.xlu0 %1041
    %v1043 = vsel %vm447, %v1027, -inf
    %1044 = vmax.xlane.f32.xlu0 %v1043
    %v1045 = vpop.xlane.xlu0 %1044
    %v1046 = vsel %vm447, %v1028, -inf
    %1047 = vmax.xlane.f32.xlu0 %v1046
    %v1048 = vpop.xlane.xlu0 %1047
    %v1049 = vsel %vm447, %v1029, -inf
    %1050 = vmax.xlane.f32.xlu0 %v1049
    %v1051 = vpop.xlane.xlu0 %1050
    %v1052 = vsel %vm447, %v1030, -inf
    %1053 = vmax.xlane.f32.xlu0 %v1052
    %v1054 = vpop.xlane.xlu0 %1053
    %v1055 = vsub.f32 %v1023, %v1033
    %v1056 = vsub.f32 %v1024, %v1036
    %v1057 = vsub.f32 %v1025, %v1039
    %v1058 = vsub.f32 %v1026, %v1042
    %v1059 = vsub.f32 %v1027, %v1045
    %v1060 = vsub.f32 %v1028, %v1048
    %v1061 = vsub.f32 %v1029, %v1051
    %v1062 = vsub.f32 %v1030, %v1054
    %v1063 = vmul.f32 %v1055, 1.442695
    %v1064 = vpow.pop %v1063
    %v1065 = vmul.f32 %v1056, 1.442695
    %v1066 = vpow.pop %v1065
    %v1067 = vmul.f32 %v1057, 1.442695
    %v1068 = vpow.pop %v1067
    %v1069 = vmul.f32 %v1058, 1.442695
    %v1070 = vpow.pop %v1069
    %v1071 = vmul.f32 %v1059, 1.442695
    %v1072 = vpow.pop %v1071
    %v1073 = vmul.f32 %v1060, 1.442695
    %v1074 = vpow.pop %v1073
    %v1075 = vmul.f32 %v1061, 1.442695
    %v1076 = vpow.pop %v1075
    %v1077 = vmul.f32 %v1062, 1.442695
    %v1078 = vpow.pop %v1077
    %v1079 = vsel %vm447, %v1064, 0.0
    %1080 = vadd.xlane.f32.xlu0 %v1079
    %v1081 = vpop.xlane.xlu0 %1080
    %v1082 = vsel %vm447, %v1066, 0.0
    %1083 = vadd.xlane.f32.xlu0 %v1082
    %v1084 = vpop.xlane.xlu0 %1083
    %v1085 = vsel %vm447, %v1068, 0.0
    %1086 = vadd.xlane.f32.xlu0 %v1085
    %v1087 = vpop.xlane.xlu0 %1086
    %v1088 = vsel %vm447, %v1070, 0.0
    %1089 = vadd.xlane.f32.xlu0 %v1088
    %v1090 = vpop.xlane.xlu0 %1089
    %v1091 = vsel %vm447, %v1072, 0.0
    %1092 = vadd.xlane.f32.xlu0 %v1091
    %v1093 = vpop.xlane.xlu0 %1092
    %v1094 = vsel %vm447, %v1074, 0.0
    %1095 = vadd.xlane.f32.xlu0 %v1094
    %v1096 = vpop.xlane.xlu0 %1095
    %v1097 = vsel %vm447, %v1076, 0.0
    %1098 = vadd.xlane.f32.xlu0 %v1097
    %v1099 = vpop.xlane.xlu0 %1098
    %v1100 = vsel %vm447, %v1078, 0.0
    %1101 = vadd.xlane.f32.xlu0 %v1100
    %v1102 = vpop.xlane.xlu0 %1101
    %v1103 = vrcp.pop %v1081
    %v1104 = vmul.f32 1.0, %v1103
    %v1105 = vrcp.pop %v1084
    %v1106 = vmul.f32 1.0, %v1105
    %v1107 = vrcp.pop %v1087
    %v1108 = vmul.f32 1.0, %v1107
    %v1109 = vrcp.pop %v1090
    %v1110 = vmul.f32 1.0, %v1109
    %v1111 = vrcp.pop %v1093
    %v1112 = vmul.f32 1.0, %v1111
    %v1113 = vrcp.pop %v1096
    %v1114 = vmul.f32 1.0, %v1113
    %v1115 = vrcp.pop %v1099
    %v1116 = vmul.f32 1.0, %v1115
    %v1117 = vrcp.pop %v1102
    %v1118 = vmul.f32 1.0, %v1117
    %v1119 = vmul.f32 %v1064, %v1104
    %v1120 = vmul.f32 %v1066, %v1106
    %v1121 = vmul.f32 %v1068, %v1108
    %v1122 = vmul.f32 %v1070, %v1110
    %v1123 = vmul.f32 %v1072, %v1112
    %v1124 = vmul.f32 %v1074, %v1114
    %v1125 = vmul.f32 %v1076, %v1116
    %v1126 = vmul.f32 %v1078, %v1118
    %v1128 = vsel %vm447, %v1119, 0
    %v1131 = vsel %vm447, %v1120, 0
    %v1134 = vsel %vm447, %v1121, 0
    %v1137 = vsel %vm447, %v1122, 0
    %v1140 = vsel %vm447, %v1123, 0
    %v1143 = vsel %vm447, %v1124, 0
    %v1146 = vsel %vm447, %v1125, 0
    %v1149 = vsel %vm447, %v1126, 0
    %1151 = vmatprep.subr.mxu0 0.0
    %1152 = vmatpush1.msra.mxu0 %v779
    %1153 = vmatprep.subr.mxu0 0.0
    %1154 = vmatpush1.msra.mxu0 %v784
    %1155 = vmatprep.subr.mxu0 0.0
    %1156 = vmatpush1.msra.mxu0 0.0
    %1157 = vmatprep.subr.mxu0 0.0
    %1158 = vmatpush1.msra.mxu0 0.0
    %1159 = vmatprep.subr.mxu0 0.0
    %1160 = vmatpush1.msra.mxu0 0.0
    %1161 = vmatprep.subr.mxu0 0.0
    %1162 = vmatpush1.msra.mxu0 0.0
    %1163 = vmatprep.subr.mxu0 0.0
    %1164 = vmatpush1.msra.mxu0 0.0
    %1165 = vmatprep.subr.mxu0 0.0
    %1166 = vmatpush1.msra.mxu0 0.0
    %1167 = vmatprep.subr.mxu0 0.0
    %1168 = vmatpush1.msra.mxu0 0.0
    %1169 = vmatprep.subr.mxu0 0.0
    %1170 = vmatpush1.msra.mxu0 0.0
    %1171 = vmatprep.subr.mxu0 0.0
    %1172 = vmatpush1.msra.mxu0 0.0
    %1173 = vmatprep.subr.mxu0 0.0
    %1174 = vmatpush1.msra.mxu0 0.0
    %1175 = vmatprep.subr.mxu0 0.0
    %1176 = vmatpush1.msra.mxu0 0.0
    %1177 = vmatprep.subr.mxu0 0.0
    %1178 = vmatpush1.msra.mxu0 0.0
    %1179 = vmatprep.subr.mxu0 0.0
    %1180 = vmatpush1.msra.mxu0 0.0
    %1181 = vmatprep.subr.mxu0 0.0
    %1182 = vmatpush1.msra.mxu0 0.0
    %1183 = vmatprep.subr.mxu0 0.0
    %1184 = vmatpush1.msra.mxu0 0.0
    %1185 = vmatprep.subr.mxu0 0.0
    %1186 = vmatpush1.msra.mxu0 0.0
    %1187 = vmatprep.subr.mxu0 0.0
    %1188 = vmatpush1.msra.mxu0 0.0
    %1189 = vmatprep.subr.mxu0 0.0
    %1190 = vmatpush1.msra.mxu0 0.0
    %1191 = vmatprep.subr.mxu0 0.0
    %1192 = vmatpush1.msra.mxu0 0.0
    %1193 = vmatprep.subr.mxu0 0.0
    %1194 = vmatpush1.msra.mxu0 0.0
    %1195 = vmatprep.subr.mxu0 0.0
    %1196 = vmatpush1.msra.mxu0 0.0
    %1197 = vmatprep.subr.mxu0 0.0
    %1198 = vmatpush1.msra.mxu0 0.0
    %1199 = vmatprep.subr.mxu0 0.0
    %1200 = vmatpush1.msra.mxu0 0.0
    %1201 = vmatprep.subr.mxu0 0.0
    %1202 = vmatpush1.msra.mxu0 0.0
    %1203 = vmatprep.subr.mxu0 0.0
    %1204 = vmatpush1.msra.mxu0 0.0
    %1205 = vmatprep.subr.mxu0 0.0
    %1206 = vmatpush1.msra.mxu0 0.0
    %1207 = vmatprep.subr.mxu0 0.0
    %1208 = vmatpush1.msra.mxu0 0.0
    %1209 = vmatprep.subr.mxu0 0.0
    %1210 = vmatpush1.msra.mxu0 0.0
    %1211 = vmatprep.subr.mxu0 0.0
    %1212 = vmatpush1.msra.mxu0 0.0
    %1213 = vmatprep.subr.mxu0 0.0
    %1214 = vmatpush1.msra.mxu0 0.0
    %1215 = vmatprep.mubr.f32.mxu0 0.0
    %1216 = vmatmul.mubr.f32.gmra.mrb[0].mxu0 %v1128
    %v1217 = vpop.f32.mrb[0].mxu0
    %v1218 = vadd.f32 0.0, %v1217
    %v1219 = vpop.f32.mrb[0].mxu0
    %1220 = vmatprep.mubr.f32.mxu0 0.0
    %1221 = vmatmul.mubr.f32.gmra.mrb[0].mxu0 %v1131
    %v1222 = vpop.f32.mrb[0].mxu0
    %v1223 = vadd.f32 0.0, %v1222
    %v1224 = vpop.f32.mrb[0].mxu0
    %1225 = vmatprep.mubr.f32.mxu0 0.0
    %1226 = vmatmul.mubr.f32.gmra.mrb[0].mxu0 %v1134
    %v1227 = vpop.f32.mrb[0].mxu0
    %v1228 = vadd.f32 0.0, %v1227
    %v1229 = vpop.f32.mrb[0].mxu0
    %1230 = vmatprep.mubr.f32.mxu0 0.0
    %1231 = vmatmul.mubr.f32.gmra.mrb[0].mxu0 %v1137
    %v1232 = vpop.f32.mrb[0].mxu0
    %v1233 = vadd.f32 0.0, %v1232
    %v1234 = vpop.f32.mrb[0].mxu0
    %1235 = vmatprep.mubr.f32.mxu0 0.0
    %1236 = vmatmul.mubr.f32.gmra.mrb[0].mxu0 %v1140
    %v1237 = vpop.f32.mrb[0].mxu0
    %v1238 = vadd.f32 0.0, %v1237
    %v1239 = vpop.f32.mrb[0].mxu0
    %1240 = vmatprep.mubr.f32.mxu0 0.0
    %1241 = vmatmul.mubr.f32.gmra.mrb[0].mxu0 %v1143
    %v1242 = vpop.f32.mrb[0].mxu0
    %v1243 = vadd.f32 0.0, %v1242
    %v1244 = vpop.f32.mrb[0].mxu0
    %1245 = vmatprep.mubr.f32.mxu0 0.0
    %1246 = vmatmul.mubr.f32.gmra.mrb[0].mxu0 %v1146
    %v1247 = vpop.f32.mrb[0].mxu0
    %v1248 = vadd.f32 0.0, %v1247
    %v1249 = vpop.f32.mrb[0].mxu0
    %1250 = vmatprep.mubr.f32.mxu0 0.0
    %1251 = vmatmul.mubr.f32.gmra.mrb[0].mxu0 %v1149
    %v1252 = vpop.f32.mrb[0].mxu0
    %v1253 = vadd.f32 0.0, %v1252
    %v1254 = vpop.f32.mrb[0].mxu0
    %1255 = vdwg.mxu0
    %v1256 = vmul.f32 %v1218, %v17
    %v1257 = vmul.f32 %v1223, %v18
    %v1258 = vmul.f32 %v1228, %v19
    %v1259 = vmul.f32 %v1233, %v20
    %v1260 = vmul.f32 %v1238, %v21
    %v1261 = vmul.f32 %v1243, %v22
    %v1262 = vmul.f32 %v1248, %v23
    %v1263 = vmul.f32 %v1253, %v24
    %v1264 = vadd.f32 %v1256, %v1258
    %v1265 = vadd.f32 %v1257, %v1259
    %v1266 = vadd.f32 %v1264, %v1260
    %v1267 = vadd.f32 %v1265, %v1261
    %v1268 = vadd.f32 %v1266, %v1262
    %v1269 = vadd.f32 %v1267, %v1263
    %v1270 = vadd.f32 %v695, %v1268
    %v1271 = vadd.f32 %v696, %v1269
    %v1272 = vlaneseq
    %v1273 = vshrl.u32 %v1272, 7
    %v1274 = vsub.s32 0, %v1273
    %v1275 = vrot.slane %v705, %v1274
    %v1276 = vadd.f32 %v1270, %v1275
    %v1277 = vadd.f32 %v1271, %v1275
    %v1278 = vmax.f32 %v1276, 0.0
    %v1279 = vmax.f32 %v1277, 0.0
    %v1280 = vld [vmem:[%s2 + $0x50] sm:$0xff]
    %v1281 = vld [vmem:[%s2 + $0x58] sm:$0xff]
    %v1282 = vld [vmem:[%s2 + $0x60] sm:$0xff]
    %v1283 = vld [vmem:[%s2 + $0x68] sm:$0xff]
    %v1284 = vld [vmem:[%s2 + $0xb0] sm:$0xff]
    %v1285 = vld [vmem:[%s2 + $0xb8] sm:$0xff]
    %v1286 = vld [vmem:[%s2 + $0xc0] sm:$0xff]
    %v1287 = vld [vmem:[%s2 + $0xc8] sm:$0xff]
    %v1288 = vld [vmem:[%s2 + $0xe0] sm:$0x1]
    %v1290 = vsel %vm122, %v1278, 0
    %v1293 = vsel %vm122, %v1279, 0
    %1295 = vmatprep.subr.mxu0 0.0
    %1296 = vmatpush1.msra.mxu0 %v1280
    %1297 = vmatprep.subr.mxu0 0.0
    %1298 = vmatpush1.msra.mxu0 %v1281
    %1299 = vmatprep.subr.mxu0 0.0
    %1300 = vmatpush1.msra.mxu0 %v1282
    %1301 = vmatprep.subr.mxu0 0.0
    %1302 = vmatpush1.msra.mxu0 %v1283
    %1303 = vmatprep.subr.mxu0 0.0
    %1304 = vmatpush1.msra.mxu0 0.0
    %1305 = vmatprep.subr.mxu0 0.0
    %1306 = vmatpush1.msra.mxu0 0.0
    %1307 = vmatprep.subr.mxu0 0.0
    %1308 = vmatpush1.msra.mxu0 0.0
    %1309 = vmatprep.subr.mxu0 0.0
    %1310 = vmatpush1.msra.mxu0 0.0
    %1311 = vmatprep.subr.mxu0 0.0
    %1312 = vmatpush1.msra.mxu0 0.0
    %1313 = vmatprep.subr.mxu0 0.0
    %1314 = vmatpush1.msra.mxu0 0.0
    %1315 = vmatprep.subr.mxu0 0.0
    %1316 = vmatpush1.msra.mxu0 0.0
    %1317 = vmatprep.subr.mxu0 0.0
    %1318 = vmatpush1.msra.mxu0 0.0
    %1319 = vmatprep.subr.mxu0 0.0
    %1320 = vmatpush1.msra.mxu0 0.0
    %1321 = vmatprep.subr.mxu0 0.0
    %1322 = vmatpush1.msra.mxu0 0.0
    %1323 = vmatprep.subr.mxu0 0.0
    %1324 = vmatpush1.msra.mxu0 0.0
    %1325 = vmatprep.subr.mxu0 0.0
    %1326 = vmatpush1.msra.mxu0 0.0
    %1327 = vmatprep.subr.mxu0 0.0
    %1328 = vmatpush1.msra.mxu0 0.0
    %1329 = vmatprep.subr.mxu0 0.0
    %1330 = vmatpush1.msra.mxu0 0.0
    %1331 = vmatprep.subr.mxu0 0.0
    %1332 = vmatpush1.msra.mxu0 0.0
    %1333 = vmatprep.subr.mxu0 0.0
    %1334 = vmatpush1.msra.mxu0 0.0
    %1335 = vmatprep.subr.mxu0 0.0
    %1336 = vmatpush1.msra.mxu0 0.0
    %1337 = vmatprep.subr.mxu0 0.0
    %1338 = vmatpush1.msra.mxu0 0.0
    %1339 = vmatprep.subr.mxu0 0.0
    %1340 = vmatpush1.msra.mxu0 0.0
    %1341 = vmatprep.subr.mxu0 0.0
    %1342 = vmatpush1.msra.mxu0 0.0
    %1343 = vmatprep.subr.mxu0 0.0
    %1344 = vmatpush1.msra.mxu0 0.0
    %1345 = vmatprep.subr.mxu0 0.0
    %1346 = vmatpush1.msra.mxu0 0.0
    %1347 = vmatprep.subr.mxu0 0.0
    %1348 = vmatpush1.msra.mxu0 0.0
    %1349 = vmatprep.subr.mxu0 0.0
    %1350 = vmatpush1.msra.mxu0 0.0
    %1351 = vmatprep.subr.mxu0 0.0
    %1352 = vmatpush1.msra.mxu0 0.0
    %1353 = vmatprep.subr.mxu0 0.0
    %1354 = vmatpush1.msra.mxu0 0.0
    %1355 = vmatprep.subr.mxu0 0.0
    %1356 = vmatpush1.msra.mxu0 0.0
    %1357 = vmatprep.subr.mxu0 0.0
    %1358 = vmatpush1.msra.mxu0 0.0
    %1359 = vmatprep.mubr.f32.mxu0 0.0
    %1360 = vmatmul.mubr.f32.gmra.mrb[0].mxu0 %v1290
    %v1361 = vpop.f32.mrb[0].mxu0
    %v1362 = vadd.f32 0.0, %v1361
    %v1363 = vpop.f32.mrb[0].mxu0
    %1364 = vmatprep.mubr.f32.mxu0 0.0
    %1365 = vmatmul.mubr.f32.gmra.mrb[0].mxu0 %v1293
    %v1366 = vpop.f32.mrb[0].mxu0
    %v1367 = vadd.f32 0.0, %v1366
    %v1368 = vpop.f32.mrb[0].mxu0
    %1369 = vdwg.mxu0
    %1370 = vxpose.xlu0.b32.start [1/16] %v1284, 128
    %1371 = vxpose.xlu0.b32.cont [2/16] %v1285, 128
    %1372 = vxpose.xlu0.b32.cont [3/16] %v1286, 128
    %1373 = vxpose.xlu0.b32.cont [4/16] %v1287, 128
    %1374 = vxpose.xlu0.b32.cont [5/16] 0.0, 128
    %1375 = vxpose.xlu0.b32.cont [6/16] 0.0, 128
    %1376 = vxpose.xlu0.b32.cont [7/16] 0.0, 128
    %1377 = vxpose.xlu0.b32.cont [8/16] 0.0, 128
    %1378 = vxpose.xlu0.b32.cont [9/16] 0.0, 128
    %1379 = vxpose.xlu0.b32.cont [10/16] 0.0, 128
    %1380 = vxpose.xlu0.b32.cont [11/16] 0.0, 128
    %1381 = vxpose.xlu0.b32.cont [12/16] 0.0, 128
    %1382 = vxpose.xlu0.b32.cont [13/16] 0.0, 128
    %1383 = vxpose.xlu0.b32.cont [14/16] 0.0, 128
    %1384 = vxpose.xlu0.b32.cont [15/16] 0.0, 128
    %1385 = vxpose.xlu0.b32.end [16/16] 0.0, 128
    %v1386 = vpop.trf.xlu0
    %v1387 = vpop.trf.xlu0
    %v1388 = vpop.trf.xlu0
    %v1389 = vpop.trf.xlu0
    %v1390 = vpop.trf.xlu0
    %v1391 = vpop.trf.xlu0
    %v1392 = vpop.trf.xlu0
    %v1393 = vpop.trf.xlu0
    %v1394 = vpop.trf.xlu0
    %v1395 = vpop.trf.xlu0
    %v1396 = vpop.trf.xlu0
    %v1397 = vpop.trf.xlu0
    %v1398 = vpop.trf.xlu0
    %v1399 = vpop.trf.xlu0
    %v1400 = vpop.trf.xlu0
    %v1401 = vpop.trf.xlu0
    %v1403 = vsel %vm122, %v1386, 0
    %1405 = vmatprep.subr.mxu0 0.0
    %1406 = vmatpush1.xpose.msra.mxu0 %v1290
    %1407 = vmatprep.subr.mxu0 0.0
    %1408 = vmatpush1.xpose.msra.mxu0 %v1293
    %1409 = vmatprep.subr.mxu0 0.0
    %1410 = vmatpush1.xpose.msra.mxu0 0.0
    %1411 = vmatprep.subr.mxu0 0.0
    %1412 = vmatpush1.xpose.msra.mxu0 0.0
    %1413 = vmatprep.subr.mxu0 0.0
    %1414 = vmatpush1.xpose.msra.mxu0 0.0
    %1415 = vmatprep.subr.mxu0 0.0
    %1416 = vmatpush1.xpose.msra.mxu0 0.0
    %1417 = vmatprep.subr.mxu0 0.0
    %1418 = vmatpush1.xpose.msra.mxu0 0.0
    %1419 = vmatprep.subr.mxu0 0.0
    %1420 = vmatpush1.xpose.msra.mxu0 0.0
    %1421 = vmatprep.subr.mxu0 0.0
    %1422 = vmatpush1.xpose.msra.mxu0 0.0
    %1423 = vmatprep.subr.mxu0 0.0
    %1424 = vmatpush1.xpose.msra.mxu0 0.0
    %1425 = vmatprep.subr.mxu0 0.0
    %1426 = vmatpush1.xpose.msra.mxu0 0.0
    %1427 = vmatprep.subr.mxu0 0.0
    %1428 = vmatpush1.xpose.msra.mxu0 0.0
    %1429 = vmatprep.subr.mxu0 0.0
    %1430 = vmatpush1.xpose.msra.mxu0 0.0
    %1431 = vmatprep.subr.mxu0 0.0
    %1432 = vmatpush1.xpose.msra.mxu0 0.0
    %1433 = vmatprep.subr.mxu0 0.0
    %1434 = vmatpush1.xpose.msra.mxu0 0.0
    %1435 = vmatprep.subr.mxu0 0.0
    %1436 = vmatpush1.xpose.msra.mxu0 0.0
    %1437 = vmatprep.subr.mxu0 0.0
    %1438 = vmatpush1.xpose.msra.mxu0 0.0
    %1439 = vmatprep.subr.mxu0 0.0
    %1440 = vmatpush1.xpose.msra.mxu0 0.0
    %1441 = vmatprep.subr.mxu0 0.0
    %1442 = vmatpush1.xpose.msra.mxu0 0.0
    %1443 = vmatprep.subr.mxu0 0.0
    %1444 = vmatpush1.xpose.msra.mxu0 0.0
    %1445 = vmatprep.subr.mxu0 0.0
    %1446 = vmatpush1.xpose.msra.mxu0 0.0
    %1447 = vmatprep.subr.mxu0 0.0
    %1448 = vmatpush1.xpose.msra.mxu0 0.0
    %1449 = vmatprep.subr.mxu0 0.0
    %1450 = vmatpush1.xpose.msra.mxu0 0.0
    %1451 = vmatprep.subr.mxu0 0.0
    %1452 = vmatpush1.xpose.msra.mxu0 0.0
    %1453 = vmatprep.subr.mxu0 0.0
    %1454 = vmatpush1.xpose.msra.mxu0 0.0
    %1455 = vmatprep.subr.mxu0 0.0
    %1456 = vmatpush1.xpose.msra.mxu0 0.0
    %1457 = vmatprep.subr.mxu0 0.0
    %1458 = vmatpush1.xpose.msra.mxu0 0.0
    %1459 = vmatprep.subr.mxu0 0.0
    %1460 = vmatpush1.xpose.msra.mxu0 0.0
    %1461 = vmatprep.subr.mxu0 0.0
    %1462 = vmatpush1.xpose.msra.mxu0 0.0
    %1463 = vmatprep.subr.mxu0 0.0
    %1464 = vmatpush1.xpose.msra.mxu0 0.0
    %1465 = vmatprep.subr.mxu0 0.0
    %1466 = vmatpush1.xpose.msra.mxu0 0.0
    %1467 = vmatprep.subr.mxu0 0.0
    %1468 = vmatpush1.xpose.msra.mxu0 0.0
    %1469 = vmatprep.mubr.f32.mxu0 0.0
    %1470 = vmatmul.mubr.f32.gmra.mrb[0].mxu0 %v1403
    %v1471 = vpop.f32.mrb[0].mxu0
    %v1472 = vadd.f32 0.0, %v1471
    %v1473 = vpop.f32.mrb[0].mxu0
    %1474 = vdwg.mxu0
    %s1475 = scalar_lea.vmem %s1, 128
    %v1476 = vld [vmem:[%s1475] sm:$0xff]
    %v1477 = vld [vmem:[%s1475 + $0x8] sm:$0xff]
    %v1478 = vld [vmem:[%s1475 + $0x10] sm:$0xff]
    %v1479 = vld [vmem:[%s1475 + $0x18] sm:$0xff]
    %v1480 = vld [vmem:[%s1475 + $0x20] sm:$0xff]
    %v1481 = vld [vmem:[%s1475 + $0x28] sm:$0xff]
    %v1482 = vld [vmem:[%s1475 + $0x30] sm:$0xff]
    %v1483 = vld [vmem:[%s1475 + $0x38] sm:$0xff]
    %v1484 = vlaneseq
    %v1485 = vshrl.u32 %v1484, 7
    %v1486 = vsub.s32 0, %v1485
    %v1487 = vrot.slane %v1472, %v1486
    %1489 = vbcast.lane.b32.xlu0 %v1487, 256
    %v1490 = vpop.permute.xlu0 %1489
    %s1492 = sor.u32 256, 8
    %1493 = vbcast.lane.b32.xlu0 %v1487, %s1492
    %v1494 = vpop.permute.xlu0 %1493
    %v1495 = vlaneseq
    %v1496 = vshrl.u32 %v1495, 7
    %v1497 = vsub.s32 1, %v1496
    %v1498 = vrot.slane %v1472, %v1497
    %1500 = vbcast.lane.b32.xlu0 %v1498, 256
    %v1501 = vpop.permute.xlu0 %1500
    %s1503 = sor.u32 256, 8
    %1504 = vbcast.lane.b32.xlu0 %v1498, %s1503
    %v1505 = vpop.permute.xlu0 %1504
    %v1506 = vlaneseq
    %v1507 = vshrl.u32 %v1506, 7
    %v1508 = vsub.s32 2, %v1507
    %v1509 = vrot.slane %v1472, %v1508
    %1511 = vbcast.lane.b32.xlu0 %v1509, 256
    %v1512 = vpop.permute.xlu0 %1511
    %s1514 = sor.u32 256, 8
    %1515 = vbcast.lane.b32.xlu0 %v1509, %s1514
    %v1516 = vpop.permute.xlu0 %1515
    %v1517 = vlaneseq
    %v1518 = vshrl.u32 %v1517, 7
    %v1519 = vsub.s32 3, %v1518
    %v1520 = vrot.slane %v1472, %v1519
    %1522 = vbcast.lane.b32.xlu0 %v1520, 256
    %v1523 = vpop.permute.xlu0 %1522
    %s1525 = sor.u32 256, 8
    %1526 = vbcast.lane.b32.xlu0 %v1520, %s1525
    %v1527 = vpop.permute.xlu0 %1526
    %v1528 = vadd.f32 %v1476, %v1490
    %v1529 = vadd.f32 %v1477, %v1494
    %v1530 = vadd.f32 %v1478, %v1501
    %v1531 = vadd.f32 %v1479, %v1505
    %v1532 = vadd.f32 %v1480, %v1512
    %v1533 = vadd.f32 %v1481, %v1516
    %v1534 = vadd.f32 %v1482, %v1523
    %v1535 = vadd.f32 %v1483, %v1527
    %v1537 = vcombine.high %v1472, %v1472
    %v1539 = vunpack.c.l.s4 1966171168
    %v1540 = vunpack.c.0.s8 %v1539
    %v1541 = vlaneseq
    %v1542 = vshrl.u32 %v1541, 7
    %v1543 = vsub.s32 %v1540, %v1542
    %v1544 = vrot.slane %v1537, %v1543
    %v1545 = vcombine.high %v1544, %v1544
    %v1547 = vunpack.c.l.s4 1966171168
    %v1548 = vunpack.c.0.s8 %v1547
    %v1549 = vlaneseq
    %v1550 = vshrl.u32 %v1549, 7
    %v1551 = vsub.s32 %v1548, %v1550
    %v1552 = vrot.slane %v1544, %v1551
    %v1554 = vunpack.c.l.s4 1966171168
    %v1555 = vunpack.c.0.s8 %v1554
    %v1556 = vlaneseq
    %v1557 = vshrl.u32 %v1556, 7
    %v1558 = vsub.s32 %v1555, %v1557
    %v1559 = vrot.slane %v1545, %v1558
    %v1560 = vcombine.high %v1552, %v1552
    %v1561 = vcombine.high %v1559, %v1559
    %v1562 = vlaneseq
    %v1563 = vshrl.u32 %v1562, 7
    %v1564 = vsub.s32 0, %v1563
    %v1565 = vrot.slane %v1552, %v1564
    %v1566 = vlaneseq
    %v1567 = vshrl.u32 %v1566, 7
    %v1568 = vsub.s32 0, %v1567
    %v1569 = vrot.slane %v1559, %v1568
    %v1570 = vlaneseq
    %v1571 = vshrl.u32 %v1570, 7
    %v1572 = vsub.s32 0, %v1571
    %v1573 = vrot.slane %v1560, %v1572
    %v1574 = vlaneseq
    %v1575 = vshrl.u32 %v1574, 7
    %v1576 = vsub.s32 0, %v1575
    %v1577 = vrot.slane %v1561, %v1576
    %v1582 = vadd.f32 %v1528, %v1565
    %v1583 = vadd.f32 %v1529, %v1565
    %v1584 = vadd.f32 %v1530, %v1569
    %v1585 = vadd.f32 %v1531, %v1569
    %v1586 = vadd.f32 %v1532, %v1573
    %v1587 = vadd.f32 %v1533, %v1573
    %v1588 = vadd.f32 %v1534, %v1577
    %v1589 = vadd.f32 %v1535, %v1577
    %vm1590 = vcmp.gt.f32.partialorder %v1582, 0.0
    %vm1591 = vcmp.gt.f32.partialorder %v1583, 0.0
    %vm1592 = vcmp.gt.f32.partialorder %v1584, 0.0
    %vm1593 = vcmp.gt.f32.partialorder %v1585, 0.0
    %vm1594 = vcmp.gt.f32.partialorder %v1586, 0.0
    %vm1595 = vcmp.gt.f32.partialorder %v1587, 0.0
    %vm1596 = vcmp.gt.f32.partialorder %v1588, 0.0
    %vm1597 = vcmp.gt.f32.partialorder %v1589, 0.0
    %v1598 = vmul.f32 %v1582, 0.2
    %v1599 = vmul.f32 %v1583, 0.2
    %v1600 = vmul.f32 %v1584, 0.2
    %v1601 = vmul.f32 %v1585, 0.2
    %v1602 = vmul.f32 %v1586, 0.2
    %v1603 = vmul.f32 %v1587, 0.2
    %v1604 = vmul.f32 %v1588, 0.2
    %v1605 = vmul.f32 %v1589, 0.2
    %v1606 = vsel %vm1590, %v1582, %v1598
    %v1607 = vsel %vm1591, %v1583, %v1599
    %v1608 = vsel %vm1592, %v1584, %v1600
    %v1609 = vsel %vm1593, %v1585, %v1601
    %v1610 = vsel %vm1594, %v1586, %v1602
    %v1611 = vsel %vm1595, %v1587, %v1603
    %v1612 = vsel %vm1596, %v1588, %v1604
    %v1613 = vsel %vm1597, %v1589, %v1605
    %v1614 = vsel %vm447, %v1606, -inf
    %1615 = vmax.xlane.f32.xlu0 %v1614
    %v1616 = vpop.xlane.xlu0 %1615
    %v1617 = vsel %vm447, %v1607, -inf
    %1618 = vmax.xlane.f32.xlu0 %v1617
    %v1619 = vpop.xlane.xlu0 %1618
    %v1620 = vsel %vm447, %v1608, -inf
    %1621 = vmax.xlane.f32.xlu0 %v1620
    %v1622 = vpop.xlane.xlu0 %1621
    %v1623 = vsel %vm447, %v1609, -inf
    %1624 = vmax.xlane.f32.xlu0 %v1623
    %v1625 = vpop.xlane.xlu0 %1624
    %v1626 = vsel %vm447, %v1610, -inf
    %1627 = vmax.xlane.f32.xlu0 %v1626
    %v1628 = vpop.xlane.xlu0 %1627
    %v1629 = vsel %vm447, %v1611, -inf
    %1630 = vmax.xlane.f32.xlu0 %v1629
    %v1631 = vpop.xlane.xlu0 %1630
    %v1632 = vsel %vm447, %v1612, -inf
    %1633 = vmax.xlane.f32.xlu0 %v1632
    %v1634 = vpop.xlane.xlu0 %1633
    %v1635 = vsel %vm447, %v1613, -inf
    %1636 = vmax.xlane.f32.xlu0 %v1635
    %v1637 = vpop.xlane.xlu0 %1636
    %v1638 = vsub.f32 %v1606, %v1616
    %v1639 = vsub.f32 %v1607, %v1619
    %v1640 = vsub.f32 %v1608, %v1622
    %v1641 = vsub.f32 %v1609, %v1625
    %v1642 = vsub.f32 %v1610, %v1628
    %v1643 = vsub.f32 %v1611, %v1631
    %v1644 = vsub.f32 %v1612, %v1634
    %v1645 = vsub.f32 %v1613, %v1637
    %v1646 = vmul.f32 %v1638, 1.442695
    %v1647 = vpow.pop %v1646
    %v1648 = vmul.f32 %v1639, 1.442695
    %v1649 = vpow.pop %v1648
    %v1650 = vmul.f32 %v1640, 1.442695
    %v1651 = vpow.pop %v1650
    %v1652 = vmul.f32 %v1641, 1.442695
    %v1653 = vpow.pop %v1652
    %v1654 = vmul.f32 %v1642, 1.442695
    %v1655 = vpow.pop %v1654
    %v1656 = vmul.f32 %v1643, 1.442695
    %v1657 = vpow.pop %v1656
    %v1658 = vmul.f32 %v1644, 1.442695
    %v1659 = vpow.pop %v1658
    %v1660 = vmul.f32 %v1645, 1.442695
    %v1661 = vpow.pop %v1660
    %v1662 = vsel %vm447, %v1647, 0.0
    %1663 = vadd.xlane.f32.xlu0 %v1662
    %v1664 = vpop.xlane.xlu0 %1663
    %v1665 = vsel %vm447, %v1649, 0.0
    %1666 = vadd.xlane.f32.xlu0 %v1665
    %v1667 = vpop.xlane.xlu0 %1666
    %v1668 = vsel %vm447, %v1651, 0.0
    %1669 = vadd.xlane.f32.xlu0 %v1668
    %v1670 = vpop.xlane.xlu0 %1669
    %v1671 = vsel %vm447, %v1653, 0.0
    %1672 = vadd.xlane.f32.xlu0 %v1671
    %v1673 = vpop.xlane.xlu0 %1672
    %v1674 = vsel %vm447, %v1655, 0.0
    %1675 = vadd.xlane.f32.xlu0 %v1674
    %v1676 = vpop.xlane.xlu0 %1675
    %v1677 = vsel %vm447, %v1657, 0.0
    %1678 = vadd.xlane.f32.xlu0 %v1677
    %v1679 = vpop.xlane.xlu0 %1678
    %v1680 = vsel %vm447, %v1659, 0.0
    %1681 = vadd.xlane.f32.xlu0 %v1680
    %v1682 = vpop.xlane.xlu0 %1681
    %v1683 = vsel %vm447, %v1661, 0.0
    %1684 = vadd.xlane.f32.xlu0 %v1683
    %v1685 = vpop.xlane.xlu0 %1684
    %v1686 = vrcp.pop %v1664
    %v1687 = vmul.f32 1.0, %v1686
    %v1688 = vrcp.pop %v1667
    %v1689 = vmul.f32 1.0, %v1688
    %v1690 = vrcp.pop %v1670
    %v1691 = vmul.f32 1.0, %v1690
    %v1692 = vrcp.pop %v1673
    %v1693 = vmul.f32 1.0, %v1692
    %v1694 = vrcp.pop %v1676
    %v1695 = vmul.f32 1.0, %v1694
    %v1696 = vrcp.pop %v1679
    %v1697 = vmul.f32 1.0, %v1696
    %v1698 = vrcp.pop %v1682
    %v1699 = vmul.f32 1.0, %v1698
    %v1700 = vrcp.pop %v1685
    %v1701 = vmul.f32 1.0, %v1700
    %v1702 = vmul.f32 %v1647, %v1687
    %v1703 = vmul.f32 %v1649, %v1689
    %v1704 = vmul.f32 %v1651, %v1691
    %v1705 = vmul.f32 %v1653, %v1693
    %v1706 = vmul.f32 %v1655, %v1695
    %v1707 = vmul.f32 %v1657, %v1697
    %v1708 = vmul.f32 %v1659, %v1699
    %v1709 = vmul.f32 %v1661, %v1701
    %v1711 = vsel %vm447, %v1702, 0
    %v1714 = vsel %vm447, %v1703, 0
    %v1717 = vsel %vm447, %v1704, 0
    %v1720 = vsel %vm447, %v1705, 0
    %v1723 = vsel %vm447, %v1706, 0
    %v1726 = vsel %vm447, %v1707, 0
    %v1729 = vsel %vm447, %v1708, 0
    %v1732 = vsel %vm447, %v1709, 0
    %1734 = vmatprep.subr.mxu0 0.0
    %1735 = vmatpush1.msra.mxu0 %v1362
    %1736 = vmatprep.subr.mxu0 0.0
    %1737 = vmatpush1.msra.mxu0 %v1367
    %1738 = vmatprep.subr.mxu0 0.0
    %1739 = vmatpush1.msra.mxu0 0.0
    %1740 = vmatprep.subr.mxu0 0.0
    %1741 = vmatpush1.msra.mxu0 0.0
    %1742 = vmatprep.subr.mxu0 0.0
    %1743 = vmatpush1.msra.mxu0 0.0
    %1744 = vmatprep.subr.mxu0 0.0
    %1745 = vmatpush1.msra.mxu0 0.0
    %1746 = vmatprep.subr.mxu0 0.0
    %1747 = vmatpush1.msra.mxu0 0.0
    %1748 = vmatprep.subr.mxu0 0.0
    %1749 = vmatpush1.msra.mxu0 0.0
    %1750 = vmatprep.subr.mxu0 0.0
    %1751 = vmatpush1.msra.mxu0 0.0
    %1752 = vmatprep.subr.mxu0 0.0
    %1753 = vmatpush1.msra.mxu0 0.0
    %1754 = vmatprep.subr.mxu0 0.0
    %1755 = vmatpush1.msra.mxu0 0.0
    %1756 = vmatprep.subr.mxu0 0.0
    %1757 = vmatpush1.msra.mxu0 0.0
    %1758 = vmatprep.subr.mxu0 0.0
    %1759 = vmatpush1.msra.mxu0 0.0
    %1760 = vmatprep.subr.mxu0 0.0
    %1761 = vmatpush1.msra.mxu0 0.0
    %1762 = vmatprep.subr.mxu0 0.0
    %1763 = vmatpush1.msra.mxu0 0.0
    %1764 = vmatprep.subr.mxu0 0.0
    %1765 = vmatpush1.msra.mxu0 0.0
    %1766 = vmatprep.subr.mxu0 0.0
    %1767 = vmatpush1.msra.mxu0 0.0
    %1768 = vmatprep.subr.mxu0 0.0
    %1769 = vmatpush1.msra.mxu0 0.0
    %1770 = vmatprep.subr.mxu0 0.0
    %1771 = vmatpush1.msra.mxu0 0.0
    %1772 = vmatprep.subr.mxu0 0.0
    %1773 = vmatpush1.msra.mxu0 0.0
    %1774 = vmatprep.subr.mxu0 0.0
    %1775 = vmatpush1.msra.mxu0 0.0
    %1776 = vmatprep.subr.mxu0 0.0
    %1777 = vmatpush1.msra.mxu0 0.0
    %1778 = vmatprep.subr.mxu0 0.0
    %1779 = vmatpush1.msra.mxu0 0.0
    %1780 = vmatprep.subr.mxu0 0.0
    %1781 = vmatpush1.msra.mxu0 0.0
    %1782 = vmatprep.subr.mxu0 0.0
    %1783 = vmatpush1.msra.mxu0 0.0
    %1784 = vmatprep.subr.mxu0 0.0
    %1785 = vmatpush1.msra.mxu0 0.0
    %1786 = vmatprep.subr.mxu0 0.0
    %1787 = vmatpush1.msra.mxu0 0.0
    %1788 = vmatprep.subr.mxu0 0.0
    %1789 = vmatpush1.msra.mxu0 0.0
    %1790 = vmatprep.subr.mxu0 0.0
    %1791 = vmatpush1.msra.mxu0 0.0
    %1792 = vmatprep.subr.mxu0 0.0
    %1793 = vmatpush1.msra.mxu0 0.0
    %1794 = vmatprep.subr.mxu0 0.0
    %1795 = vmatpush1.msra.mxu0 0.0
    %1796 = vmatprep.subr.mxu0 0.0
    %1797 = vmatpush1.msra.mxu0 0.0
    %1798 = vmatprep.mubr.f32.mxu0 0.0
    %1799 = vmatmul.mubr.f32.gmra.mrb[0].mxu0 %v1711
    %v1800 = vpop.f32.mrb[0].mxu0
    %v1801 = vadd.f32 0.0, %v1800
    %v1802 = vpop.f32.mrb[0].mxu0
    %1803 = vmatprep.mubr.f32.mxu0 0.0
    %1804 = vmatmul.mubr.f32.gmra.mrb[0].mxu0 %v1714
    %v1805 = vpop.f32.mrb[0].mxu0
    %v1806 = vadd.f32 0.0, %v1805
    %v1807 = vpop.f32.mrb[0].mxu0
    %1808 = vmatprep.mubr.f32.mxu0 0.0
    %1809 = vmatmul.mubr.f32.gmra.mrb[0].mxu0 %v1717
    %v1810 = vpop.f32.mrb[0].mxu0
    %v1811 = vadd.f32 0.0, %v1810
    %v1812 = vpop.f32.mrb[0].mxu0
    %1813 = vmatprep.mubr.f32.mxu0 0.0
    %1814 = vmatmul.mubr.f32.gmra.mrb[0].mxu0 %v1720
    %v1815 = vpop.f32.mrb[0].mxu0
    %v1816 = vadd.f32 0.0, %v1815
    %v1817 = vpop.f32.mrb[0].mxu0
    %1818 = vmatprep.mubr.f32.mxu0 0.0
    %1819 = vmatmul.mubr.f32.gmra.mrb[0].mxu0 %v1723
    %v1820 = vpop.f32.mrb[0].mxu0
    %v1821 = vadd.f32 0.0, %v1820
    %v1822 = vpop.f32.mrb[0].mxu0
    %1823 = vmatprep.mubr.f32.mxu0 0.0
    %1824 = vmatmul.mubr.f32.gmra.mrb[0].mxu0 %v1726
    %v1825 = vpop.f32.mrb[0].mxu0
    %v1826 = vadd.f32 0.0, %v1825
    %v1827 = vpop.f32.mrb[0].mxu0
    %1828 = vmatprep.mubr.f32.mxu0 0.0
    %1829 = vmatmul.mubr.f32.gmra.mrb[0].mxu0 %v1729
    %v1830 = vpop.f32.mrb[0].mxu0
    %v1831 = vadd.f32 0.0, %v1830
    %v1832 = vpop.f32.mrb[0].mxu0
    %1833 = vmatprep.mubr.f32.mxu0 0.0
    %1834 = vmatmul.mubr.f32.gmra.mrb[0].mxu0 %v1732
    %v1835 = vpop.f32.mrb[0].mxu0
    %v1836 = vadd.f32 0.0, %v1835
    %v1837 = vpop.f32.mrb[0].mxu0
    %1838 = vdwg.mxu0
    %v1839 = vmul.f32 %v1801, %v17
    %v1840 = vmul.f32 %v1806, %v18
    %v1841 = vmul.f32 %v1811, %v19
    %v1842 = vmul.f32 %v1816, %v20
    %v1843 = vmul.f32 %v1821, %v21
    %v1844 = vmul.f32 %v1826, %v22
    %v1845 = vmul.f32 %v1831, %v23
    %v1846 = vmul.f32 %v1836, %v24
    %v1847 = vadd.f32 %v1839, %v1841
    %v1848 = vadd.f32 %v1840, %v1842
    %v1849 = vadd.f32 %v1847, %v1843
    %v1850 = vadd.f32 %v1848, %v1844
    %v1851 = vadd.f32 %v1849, %v1845
    %v1852 = vadd.f32 %v1850, %v1846
    %v1853 = vadd.f32 %v1278, %v1851
    %v1854 = vadd.f32 %v1279, %v1852
    %v1855 = vlaneseq
    %v1856 = vshrl.u32 %v1855, 7
    %v1857 = vsub.s32 0, %v1856
    %v1858 = vrot.slane %v1288, %v1857
    %v1859 = vadd.f32 %v1853, %v1858
    %v1860 = vadd.f32 %v1854, %v1858
    %v1861 = vmax.f32 %v1859, 0.0
    %v1862 = vmax.f32 %v1860, 0.0
    %1863 = vst.msk [vmem:[#allocation2] sm:$0xff] %vm122, %v1861
    %1864 = vst.msk [vmem:[#allocation2 + $0x8] sm:$0xff] %vm122, %v1862
    // Predicated region
    $region14: #{gatc_forward.1} parent=1 // pred_check
      _
    $region15: #{gatc_forward.1} parent=1 // pred_check_branch
      %1866 = sbr.rel (0) target = $region17
    $region16: #{gatc_forward.1} parent=1 // pred_region
      %s1868 = ssub.s32 256, 256
      %1869 = vsyncadd [#allocation3], %s1868
      %s1870 = sshll.u32 [#allocation2], 4
      %s1871 = int_to_ptr.vmem [resolvable:$true] %s1870
      %1876 = dma.vmem_to_hbm [thread:$0]  %s1871, 256, %s3, [#allocation3], 128, 128, 8
    $region17: #{gatc_forward.1} parent=1 // pred_fallthru
      _
    // Predicated region
    $region18: #{gatc_forward.1} parent=1 // pred_check
      _
    $region19: #{gatc_forward.1} parent=1 // pred_check_branch
      %1878 = sbr.rel (0) target = $region21
    $region20: #{gatc_forward.1} parent=1 // pred_region
      %1879 = dma.done [#allocation3], 256
    $region21: #{gatc_forward.1} parent=1 // pred_fallthru
      _
    %1880 = vsyncpa [#allocation3], 1

</llo_original>
